<compile_context>
chip_gen: v7x
topology: tpu7x:2x2x1
jax: 0.10.0
libtpu: 0.0.40
codegen_flags: <defaults>
</compile_context>

<pallas_src>
import math
from functools import partial

import numpy as np
import jax
import jax.numpy as jnp
from jax.experimental import pallas as pl
from jax.experimental.pallas import tpu as pltpu


# ---------------------------------------------------------------------------
# Host-side parameter setup (deterministic, run once per weight set)
# ---------------------------------------------------------------------------
def _embed_1q(gate, wire, n_qubits):
    ops = [np.eye(2, dtype=np.complex128)] * n_qubits
    ops[wire] = gate
    out = ops[0]
    for o in ops[1:]:
        out = np.kron(out, o)
    return out


def _rz(a):
    return np.array([[np.exp(-0.5j * a), 0.0], [0.0, np.exp(0.5j * a)]],
                    dtype=np.complex128)


def _ry(a):
    c, s = np.cos(a / 2.0), np.sin(a / 2.0)
    return np.array([[c, -s], [s, c]], dtype=np.complex128)


def _rot(phi, theta, omega):
    # PennyLane Rot(phi, theta, omega) = RZ(omega) RY(theta) RZ(phi)
    return _rz(omega) @ _ry(theta) @ _rz(phi)


def _cnot(control, target, n_qubits):
    D = 1 << n_qubits
    mc = 1 << (n_qubits - 1 - control)
    mt = 1 << (n_qubits - 1 - target)
    U = np.zeros((D, D), dtype=np.complex128)
    for b in range(D):
        if b & mc:
            U[b ^ mt, b] = 1.0
        else:
            U[b, b] = 1.0
    return U


def build_entangler_unitary(weights, n_qubits):
    """Full unitary of StronglyEntanglingLayers(weights, ranges=ones, CNOT)."""
    L, M, _ = weights.shape
    D = 1 << n_qubits
    U = np.eye(D, dtype=np.complex128)
    for l in range(L):
        layer = np.eye(D, dtype=np.complex128)
        for w in range(M):
            g = _rot(weights[l, w, 0], weights[l, w, 1], weights[l, w, 2])
            layer = _embed_1q(g, w, n_qubits) @ layer
        if M > 1:
            r = 1  # ranges = np.ones(...)
            for w in range(M):
                layer = _cnot(w, (w + r) % M, n_qubits) @ layer
        U = layer @ U
    return U


def build_y_pairing(n_qubits):
    """Real antisymmetric A_q with Y_q = i*A_q  =>  <Y_q> = 2 * im^T A_q re."""
    D = 1 << n_qubits
    W = np.zeros((n_qubits, D, D), dtype=np.float32)
    for q in range(n_qubits):
        m = 1 << (n_qubits - 1 - q)
        for b in range(D):
            if b & m:
                W[q, b, b ^ m] = 1.0
            else:
                W[q, b, b | m] = -1.0
    return W


def build_vqc_constants(weights, n_qubits):
    """Host-side constant matrices consumed by the kernel (built ONCE).

    Returns float32 numpy arrays:
      v_re_t, v_im_t : (GD, GD)          block-diag (U_g @ diag((-i)^popcount))^T
      p_cos, p_sin   : (nq, S, GD)       0/1 selection matrices for the RX
                                         product-state magnitudes (sel_i =
                                         cos_half @ p_cos[i] + sin_half @ p_sin[i])
      wt             : (nq, GD, GD)      block-diag A_q^T (Pauli-Y pairing)
      s2             : (nq, GD, S)       segmented reduce (x2) + column scatter
    with S = size_in, GD = G * 2^nq.
    """
    G, L, nq, _ = weights.shape
    D = 1 << nq
    GD = G * D
    size_in = G * nq

    # RX product-state phase (-i)^popcount(b), folded into the unitary so the
    # in-kernel state is purely real.
    pop = np.array([bin(b).count("1") for b in range(D)])
    phase = (-1j) ** pop

    v_re_t = np.zeros((GD, GD), np.float32)
    v_im_t = np.zeros((GD, GD), np.float32)
    for g in range(G):
        U = build_entangler_unitary(weights[g], nq)
        V = U * phase[None, :]                       # U @ diag(phase)
        sl = slice(g * D, (g + 1) * D)
        v_re_t[sl, sl] = V.T.real
        v_im_t[sl, sl] = V.T.imag

    # Selection matrices: sel_i[:, g*D+b] = cos(x[:,g*nq+i]/2) if bit_i(b)==0
    # else sin(x[:,g*nq+i]/2).  Two matrices so no in-kernel lane concat.
    p_cos = np.zeros((nq, size_in, GD), np.float32)
    p_sin = np.zeros((nq, size_in, GD), np.float32)
    for i in range(nq):
        for g in range(G):
            f = g * nq + i
            for b in range(D):
                if (b >> (nq - 1 - i)) & 1:
                    p_sin[i, f, g * D + b] = 1.0
                else:
                    p_cos[i, f, g * D + b] = 1.0

    # Per-q Pauli-Y pairing (block-diag over groups) and fused reduce+scatter.
    # The old `tmat` tiling constant/matmul is eliminated.
    A = build_y_pairing(nq)                          # (nq, D, D)
    wt = np.zeros((nq, GD, GD), np.float32)
    s2 = np.zeros((nq, GD, size_in), np.float32)
    for q in range(nq):
        for g in range(G):
            sl = slice(g * D, (g + 1) * D)
            wt[q, sl, sl] = A[q].T
            s2[q, sl, g * nq + q] = 2.0              # <Y_q> = 2 * im^T A_q re
    return v_re_t, v_im_t, p_cos, p_sin, wt, s2


# ---------------------------------------------------------------------------
# Pallas kernel (batch-tiled grid, constants VMEM-resident, MXU-heavy)
# ---------------------------------------------------------------------------
def _vqc_kernel(x_ref, vre_ref, vim_ref, pc_ref, ps_ref, wt_ref, s2_ref,
                out_ref, *, n_qubits):
    nq = n_qubits
    x = x_ref[...].astype(jnp.float32)               # (TB, size_in) angles
    c = jnp.cos(0.5 * x)                             # EUP transcendentals
    s = jnp.sin(0.5 * x)

    # RX product-state magnitudes on the flat (TB, G*D) layout via 2*nq tiny
    # MXU matmuls (selection matrices built on host), instead of the old
    # per-(g,i) iota/where lane-broadcast loop.
    mag = None
    for i in range(nq):
        sel = (jnp.dot(c, pc_ref[i], preferred_element_type=jnp.float32) +
               jnp.dot(s, ps_ref[i], preferred_element_type=jnp.float32))
        mag = sel if mag is None else mag * sel

    # psi = V_g @ mag_g per group, batched as mag @ blockdiag(V_g^T).
    # The (-i)^popcount phase lives in V on host, so the state is real/imag f32.
    re = jnp.dot(mag, vre_ref[...], preferred_element_type=jnp.float32)
    im = jnp.dot(mag, vim_ref[...], preferred_element_type=jnp.float32)

    # Pauli-Y readout: <Y_{g,q}> = 2 * im_g^T A_q re_g.
    #   a_q = re @ blockdiag(A_q^T)                  (one (GD,GD) matmul per q)
    #   acc += (im * a_q) @ s2_q                     (segmented reduce x2 AND
    #                                                 scatter into column g*nq+q,
    #                                                 torch.cat(dim=1) order)
    acc = None
    for q in range(nq):
        a_q = jnp.dot(re, wt_ref[q], preferred_element_type=jnp.float32)
        contrib = jnp.dot(im * a_q, s2_ref[q],
                          preferred_element_type=jnp.float32)
        acc = contrib if acc is None else acc + contrib
    # TODO(synk): output last dim (size_in) < 128 lanes -> masked partial
    # stores; only material at very large B, left as-is for the default shapes.
    out_ref[...] = acc.astype(out_ref.dtype)


def make_vqc_forward(weights, n_qubits, size_in):
    """Build a jitted forward(x) -> (B, size_in) for a fixed weight set.

    Host-side unitary construction runs exactly once here (not per call).
    """
    w = np.asarray(weights, dtype=np.float64)
    G, L, nq, _ = w.shape
    assert nq == n_qubits
    # TODO(synk): the PyTorch module allows a ragged last chunk when
    # size_in % n_qubits != 0; only the evenly-divisible case is implemented.
    assert size_in == G * nq, "size_in must equal n_groups * n_qubits"
    # TODO(synk): entangler unitaries are baked on host from `weights`, so this
    # path is inference-only (no gradient flow to the quantum weights).

    D = 1 << nq
    GD = G * D

    consts_np = build_vqc_constants(w, nq)
    consts = tuple(jnp.asarray(m) for m in consts_np)
    const_bytes = int(sum(m.size for m in consts_np)) * 4

    kernel = partial(_vqc_kernel, n_qubits=nq)

    # Constants: full-shape blocks whose block index never changes, so Pallas
    # keeps them resident in VMEM across all grid steps.
    const_specs = [
        pl.BlockSpec((GD, GD), lambda i: (0, 0)),                # vre^T blockdiag
        pl.BlockSpec((GD, GD), lambda i: (0, 0)),                # vim^T blockdiag
        pl.BlockSpec((nq, size_in, GD), lambda i: (0, 0, 0)),    # p_cos
        pl.BlockSpec((nq, size_in, GD), lambda i: (0, 0, 0)),    # p_sin
        pl.BlockSpec((nq, GD, GD), lambda i: (0, 0, 0)),         # A_q^T blockdiag
        pl.BlockSpec((nq, GD, size_in), lambda i: (0, 0, 0)),    # reduce+scatter
    ]

    @jax.jit
    def forward(x):
        B = x.shape[0]
        x32 = x.astype(jnp.float32)

        # Batch tile: multiple of 8 sublanes.  Pad B up, slice back at the end.
        B8 = -(-B // 8) * 8
        TB = B8 if B8 <= 512 else 256
        B_pad = -(-B // TB) * TB
        if B_pad != B:
            x32 = jnp.pad(x32, ((0, B_pad - B), (0, 0)))
        grid = (B_pad // TB,)

        # VMEM budget from the actual footprint (constants + double-buffered
        # x/out blocks + activation slabs), clamped to the smallest per-core
        # physical ceiling across generations (v7x: 64 MiB/TC).
        block_bytes = 2 * TB * size_in * 4                       # x + out blocks
        act_bytes = TB * (4 * size_in + 8 * GD) * 4              # c,s,mag,re,im,a_q,...
        needed = 2 * (const_bytes + block_bytes) + act_bytes + (2 << 20)
        vmem_limit = int(min(max(needed, 32 << 20), 64 << 20))

        flops_per_row = (2 * nq * 2 * size_in * GD               # selection matmuls
                         + 2 * 2 * GD * GD                       # re, im
                         + nq * (2 * GD * GD + 2 * GD * size_in))  # readout
        cost = pl.CostEstimate(
            flops=int(B_pad * flops_per_row),
            transcendentals=int(2 * B_pad * size_in),
            bytes_accessed=int(const_bytes + 2 * B_pad * size_in * 4))

        out = pl.pallas_call(
            kernel,
            out_shape=jax.ShapeDtypeStruct((B_pad, size_in), jnp.float32),
            grid=grid,
            in_specs=[pl.BlockSpec((TB, size_in), lambda i: (i, 0))] + const_specs,
            out_specs=pl.BlockSpec((TB, size_in), lambda i: (i, 0)),
            compiler_params=pltpu.CompilerParams(
                dimension_semantics=("parallel",),   # dual-TC shard on v7x
                vmem_limit_bytes=vmem_limit),
            cost_estimate=cost,
        )(x32, *consts)
        return out[:B]

    return forward


# ---------------------------------------------------------------------------
# Pure numpy reference (statevector simulation) for verification
# ---------------------------------------------------------------------------
def reference_forward(x, weights):
    x = np.asarray(x, dtype=np.float64)
    w = np.asarray(weights, dtype=np.float64)
    B, size_in = x.shape
    G, L, nq, _ = w.shape
    Y = np.array([[0.0, -1j], [1j, 0.0]], dtype=np.complex128)
    Yq = [_embed_1q(Y, q, nq) for q in range(nq)]
    outs = []
    for g in range(G):
        U = build_entangler_unitary(w[g], nq)
        xg = x[:, g * nq:(g + 1) * nq]
        res = np.zeros((B, nq))
        for bi in range(B):
            psi = np.array([1.0 + 0j])
            for q in range(nq):
                a = xg[bi, q]
                psi = np.kron(psi, np.array([np.cos(a / 2), -1j * np.sin(a / 2)]))
            psi = U @ psi
            for q in range(nq):
                res[bi, q] = np.real(np.conj(psi) @ (Yq[q] @ psi))
        outs.append(res)
    return np.concatenate(outs, axis=1)


if __name__ == "__main__":
    # Small, module-consistent shapes: size_in=8, n_qubits=4, n_qdepth=3
    # (n_qdepth=3 is implied by ranges=np.ones(3) in the original qnode).
    B, size_in, n_qubits, n_qdepth = 2, 8, 4, 3
    G = math.ceil(size_in / n_qubits)

    key = jax.random.PRNGKey(0)
    kx, kw = jax.random.split(key)
    x = jax.random.normal(kx, (B, size_in), dtype=jnp.float32)
    weights = jax.random.uniform(kw, (G, n_qdepth, n_qubits, 3),
                                 minval=0.0, maxval=2.0 * np.pi,
                                 dtype=jnp.float32)

    forward = make_vqc_forward(weights, n_qubits, size_in)  # host setup once
    out = jax.block_until_ready(forward(x))

    ref = reference_forward(np.asarray(x), np.asarray(weights))
    np.testing.assert_allclose(np.asarray(out), ref, rtol=1e-3, atol=1e-4)

    print("KERNEL_OK")
</pallas_src>

<mosaic_0001>
module attributes {stable_mosaic.version = 11 : i64} {
  func.func @_vqc_kernel(%arg0: i32, %arg1: memref<8x8xf32, #tpu.memory_space<vmem>>, %arg2: memref<32x32xf32, #tpu.memory_space<vmem>>, %arg3: memref<32x32xf32, #tpu.memory_space<vmem>>, %arg4: memref<4x8x32xf32, #tpu.memory_space<vmem>>, %arg5: memref<4x8x32xf32, #tpu.memory_space<vmem>>, %arg6: memref<4x32x32xf32, #tpu.memory_space<vmem>>, %arg7: memref<4x32x8xf32, #tpu.memory_space<vmem>>, %arg8: memref<8x8xf32, #tpu.memory_space<vmem>>) attributes {dimension_semantics = [#tpu.dimension_semantics<parallel>], iteration_bounds = array<i64: 1>, scalar_prefetch = 0 : i64, scratch_operands = 0 : i64, tpu.core_type = #tpu.core_type<tc>, window_params = [{transform_indices = @transform_0, window_bounds = array<i64: 8, 8>}, {pipeline_mode = #tpu.pipeline_mode<synchronous>, transform_indices = @transform_1, window_bounds = array<i64: 32, 32>}, {pipeline_mode = #tpu.pipeline_mode<synchronous>, transform_indices = @transform_2, window_bounds = array<i64: 32, 32>}, {pipeline_mode = #tpu.pipeline_mode<synchronous>, transform_indices = @transform_3, window_bounds = array<i64: 4, 8, 32>}, {pipeline_mode = #tpu.pipeline_mode<synchronous>, transform_indices = @transform_4, window_bounds = array<i64: 4, 8, 32>}, {pipeline_mode = #tpu.pipeline_mode<synchronous>, transform_indices = @transform_5, window_bounds = array<i64: 4, 32, 32>}, {pipeline_mode = #tpu.pipeline_mode<synchronous>, transform_indices = @transform_6, window_bounds = array<i64: 4, 32, 8>}, {transform_indices = @transform_7, window_bounds = array<i64: 8, 8>}]} {
    %c0 = arith.constant 0 : index
    %c0_0 = arith.constant 0 : index
    %0 = vector.load %arg1[%c0, %c0_0] : memref<8x8xf32, #tpu.memory_space<vmem>>, vector<8x8xf32>
    %cst = arith.constant 5.000000e-01 : f32
    %1 = vector.broadcast %cst : f32 to vector<8x8xf32>
    %2 = arith.mulf %1, %0 : vector<8x8xf32>
    %3 = math.cos %2 : vector<8x8xf32>
    %cst_1 = arith.constant 5.000000e-01 : f32
    %4 = vector.broadcast %cst_1 : f32 to vector<8x8xf32>
    %5 = arith.mulf %4, %0 : vector<8x8xf32>
    %6 = math.sin %5 : vector<8x8xf32>
    %c0_2 = arith.constant 0 : index
    %c0_3 = arith.constant 0 : index
    %c0_4 = arith.constant 0 : index
    %7 = vector.load %arg4[%c0_2, %c0_3, %c0_4] : memref<4x8x32xf32, #tpu.memory_space<vmem>>, vector<1x8x32xf32>
    %8 = vector.shape_cast %7 : vector<1x8x32xf32> to vector<8x32xf32>
    %cst_5 = arith.constant dense<0.000000e+00> : vector<8x32xf32>
    %9 = tpu.matmul %3, %8, %cst_5 {dimension_numbers = #tpu.dot_dimension_numbers<[1], [0], [0], [1], [0, 0, 1, 1], [], []>} : vector<8x8xf32>, vector<8x32xf32>, vector<8x32xf32> -> vector<8x32xf32>
    %c0_6 = arith.constant 0 : index
    %c0_7 = arith.constant 0 : index
    %c0_8 = arith.constant 0 : index
    %10 = vector.load %arg5[%c0_6, %c0_7, %c0_8] : memref<4x8x32xf32, #tpu.memory_space<vmem>>, vector<1x8x32xf32>
    %11 = vector.shape_cast %10 : vector<1x8x32xf32> to vector<8x32xf32>
    %cst_9 = arith.constant dense<0.000000e+00> : vector<8x32xf32>
    %12 = tpu.matmul %6, %11, %cst_9 {dimension_numbers = #tpu.dot_dimension_numbers<[1], [0], [0], [1], [0, 0, 1, 1], [], []>} : vector<8x8xf32>, vector<8x32xf32>, vector<8x32xf32> -> vector<8x32xf32>
    %13 = arith.addf %9, %12 : vector<8x32xf32>
    %c1 = arith.constant 1 : index
    %c0_10 = arith.constant 0 : index
    %c0_11 = arith.constant 0 : index
    %14 = vector.load %arg4[%c1, %c0_10, %c0_11] : memref<4x8x32xf32, #tpu.memory_space<vmem>>, vector<1x8x32xf32>
    %15 = vector.shape_cast %14 : vector<1x8x32xf32> to vector<8x32xf32>
    %cst_12 = arith.constant dense<0.000000e+00> : vector<8x32xf32>
    %16 = tpu.matmul %3, %15, %cst_12 {dimension_numbers = #tpu.dot_dimension_numbers<[1], [0], [0], [1], [0, 0, 1, 1], [], []>} : vector<8x8xf32>, vector<8x32xf32>, vector<8x32xf32> -> vector<8x32xf32>
    %c1_13 = arith.constant 1 : index
    %c0_14 = arith.constant 0 : index
    %c0_15 = arith.constant 0 : index
    %17 = vector.load %arg5[%c1_13, %c0_14, %c0_15] : memref<4x8x32xf32, #tpu.memory_space<vmem>>, vector<1x8x32xf32>
    %18 = vector.shape_cast %17 : vector<1x8x32xf32> to vector<8x32xf32>
    %cst_16 = arith.constant dense<0.000000e+00> : vector<8x32xf32>
    %19 = tpu.matmul %6, %18, %cst_16 {dimension_numbers = #tpu.dot_dimension_numbers<[1], [0], [0], [1], [0, 0, 1, 1], [], []>} : vector<8x8xf32>, vector<8x32xf32>, vector<8x32xf32> -> vector<8x32xf32>
    %20 = arith.addf %16, %19 : vector<8x32xf32>
    %21 = arith.mulf %13, %20 : vector<8x32xf32>
    %c2 = arith.constant 2 : index
    %c0_17 = arith.constant 0 : index
    %c0_18 = arith.constant 0 : index
    %22 = vector.load %arg4[%c2, %c0_17, %c0_18] : memref<4x8x32xf32, #tpu.memory_space<vmem>>, vector<1x8x32xf32>
    %23 = vector.shape_cast %22 : vector<1x8x32xf32> to vector<8x32xf32>
    %cst_19 = arith.constant dense<0.000000e+00> : vector<8x32xf32>
    %24 = tpu.matmul %3, %23, %cst_19 {dimension_numbers = #tpu.dot_dimension_numbers<[1], [0], [0], [1], [0, 0, 1, 1], [], []>} : vector<8x8xf32>, vector<8x32xf32>, vector<8x32xf32> -> vector<8x32xf32>
    %c2_20 = arith.constant 2 : index
    %c0_21 = arith.constant 0 : index
    %c0_22 = arith.constant 0 : index
    %25 = vector.load %arg5[%c2_20, %c0_21, %c0_22] : memref<4x8x32xf32, #tpu.memory_space<vmem>>, vector<1x8x32xf32>
    %26 = vector.shape_cast %25 : vector<1x8x32xf32> to vector<8x32xf32>
    %cst_23 = arith.constant dense<0.000000e+00> : vector<8x32xf32>
    %27 = tpu.matmul %6, %26, %cst_23 {dimension_numbers = #tpu.dot_dimension_numbers<[1], [0], [0], [1], [0, 0, 1, 1], [], []>} : vector<8x8xf32>, vector<8x32xf32>, vector<8x32xf32> -> vector<8x32xf32>
    %28 = arith.addf %24, %27 : vector<8x32xf32>
    %29 = arith.mulf %21, %28 : vector<8x32xf32>
    %c3 = arith.constant 3 : index
    %c0_24 = arith.constant 0 : index
    %c0_25 = arith.constant 0 : index
    %30 = vector.load %arg4[%c3, %c0_24, %c0_25] : memref<4x8x32xf32, #tpu.memory_space<vmem>>, vector<1x8x32xf32>
    %31 = vector.shape_cast %30 : vector<1x8x32xf32> to vector<8x32xf32>
    %cst_26 = arith.constant dense<0.000000e+00> : vector<8x32xf32>
    %32 = tpu.matmul %3, %31, %cst_26 {dimension_numbers = #tpu.dot_dimension_numbers<[1], [0], [0], [1], [0, 0, 1, 1], [], []>} : vector<8x8xf32>, vector<8x32xf32>, vector<8x32xf32> -> vector<8x32xf32>
    %c3_27 = arith.constant 3 : index
    %c0_28 = arith.constant 0 : index
    %c0_29 = arith.constant 0 : index
    %33 = vector.load %arg5[%c3_27, %c0_28, %c0_29] : memref<4x8x32xf32, #tpu.memory_space<vmem>>, vector<1x8x32xf32>
    %34 = vector.shape_cast %33 : vector<1x8x32xf32> to vector<8x32xf32>
    %cst_30 = arith.constant dense<0.000000e+00> : vector<8x32xf32>
    %35 = tpu.matmul %6, %34, %cst_30 {dimension_numbers = #tpu.dot_dimension_numbers<[1], [0], [0], [1], [0, 0, 1, 1], [], []>} : vector<8x8xf32>, vector<8x32xf32>, vector<8x32xf32> -> vector<8x32xf32>
    %36 = arith.addf %32, %35 : vector<8x32xf32>
    %37 = arith.mulf %29, %36 : vector<8x32xf32>
    %c0_31 = arith.constant 0 : index
    %c0_32 = arith.constant 0 : index
    %38 = vector.load %arg2[%c0_31, %c0_32] : memref<32x32xf32, #tpu.memory_space<vmem>>, vector<32x32xf32>
    %cst_33 = arith.constant dense<0.000000e+00> : vector<8x32xf32>
    %39 = tpu.matmul %37, %38, %cst_33 {dimension_numbers = #tpu.dot_dimension_numbers<[1], [0], [0], [1], [0, 0, 1, 1], [], []>} : vector<8x32xf32>, vector<32x32xf32>, vector<8x32xf32> -> vector<8x32xf32>
    %c0_34 = arith.constant 0 : index
    %c0_35 = arith.constant 0 : index
    %40 = vector.load %arg3[%c0_34, %c0_35] : memref<32x32xf32, #tpu.memory_space<vmem>>, vector<32x32xf32>
    %cst_36 = arith.constant dense<0.000000e+00> : vector<8x32xf32>
    %41 = tpu.matmul %37, %40, %cst_36 {dimension_numbers = #tpu.dot_dimension_numbers<[1], [0], [0], [1], [0, 0, 1, 1], [], []>} : vector<8x32xf32>, vector<32x32xf32>, vector<8x32xf32> -> vector<8x32xf32>
    %c0_37 = arith.constant 0 : index
    %c0_38 = arith.constant 0 : index
    %c0_39 = arith.constant 0 : index
    %42 = vector.load %arg6[%c0_37, %c0_38, %c0_39] : memref<4x32x32xf32, #tpu.memory_space<vmem>>, vector<1x32x32xf32>
    %43 = vector.shape_cast %42 : vector<1x32x32xf32> to vector<32x32xf32>
    %cst_40 = arith.constant dense<0.000000e+00> : vector<8x32xf32>
    %44 = tpu.matmul %39, %43, %cst_40 {dimension_numbers = #tpu.dot_dimension_numbers<[1], [0], [0], [1], [0, 0, 1, 1], [], []>} : vector<8x32xf32>, vector<32x32xf32>, vector<8x32xf32> -> vector<8x32xf32>
    %45 = arith.mulf %41, %44 : vector<8x32xf32>
    %c0_41 = arith.constant 0 : index
    %c0_42 = arith.constant 0 : index
    %c0_43 = arith.constant 0 : index
    %46 = vector.load %arg7[%c0_41, %c0_42, %c0_43] : memref<4x32x8xf32, #tpu.memory_space<vmem>>, vector<1x32x8xf32>
    %47 = vector.shape_cast %46 : vector<1x32x8xf32> to vector<32x8xf32>
    %cst_44 = arith.constant dense<0.000000e+00> : vector<8x8xf32>
    %48 = tpu.matmul %45, %47, %cst_44 {dimension_numbers = #tpu.dot_dimension_numbers<[1], [0], [0], [1], [0, 0, 1, 1], [], []>} : vector<8x32xf32>, vector<32x8xf32>, vector<8x8xf32> -> vector<8x8xf32>
    %c1_45 = arith.constant 1 : index
    %c0_46 = arith.constant 0 : index
    %c0_47 = arith.constant 0 : index
    %49 = vector.load %arg6[%c1_45, %c0_46, %c0_47] : memref<4x32x32xf32, #tpu.memory_space<vmem>>, vector<1x32x32xf32>
    %50 = vector.shape_cast %49 : vector<1x32x32xf32> to vector<32x32xf32>
    %cst_48 = arith.constant dense<0.000000e+00> : vector<8x32xf32>
    %51 = tpu.matmul %39, %50, %cst_48 {dimension_numbers = #tpu.dot_dimension_numbers<[1], [0], [0], [1], [0, 0, 1, 1], [], []>} : vector<8x32xf32>, vector<32x32xf32>, vector<8x32xf32> -> vector<8x32xf32>
    %52 = arith.mulf %41, %51 : vector<8x32xf32>
    %c1_49 = arith.constant 1 : index
    %c0_50 = arith.constant 0 : index
    %c0_51 = arith.constant 0 : index
    %53 = vector.load %arg7[%c1_49, %c0_50, %c0_51] : memref<4x32x8xf32, #tpu.memory_space<vmem>>, vector<1x32x8xf32>
    %54 = vector.shape_cast %53 : vector<1x32x8xf32> to vector<32x8xf32>
    %cst_52 = arith.constant dense<0.000000e+00> : vector<8x8xf32>
    %55 = tpu.matmul %52, %54, %cst_52 {dimension_numbers = #tpu.dot_dimension_numbers<[1], [0], [0], [1], [0, 0, 1, 1], [], []>} : vector<8x32xf32>, vector<32x8xf32>, vector<8x8xf32> -> vector<8x8xf32>
    %56 = arith.addf %48, %55 : vector<8x8xf32>
    %c2_53 = arith.constant 2 : index
    %c0_54 = arith.constant 0 : index
    %c0_55 = arith.constant 0 : index
    %57 = vector.load %arg6[%c2_53, %c0_54, %c0_55] : memref<4x32x32xf32, #tpu.memory_space<vmem>>, vector<1x32x32xf32>
    %58 = vector.shape_cast %57 : vector<1x32x32xf32> to vector<32x32xf32>
    %cst_56 = arith.constant dense<0.000000e+00> : vector<8x32xf32>
    %59 = tpu.matmul %39, %58, %cst_56 {dimension_numbers = #tpu.dot_dimension_numbers<[1], [0], [0], [1], [0, 0, 1, 1], [], []>} : vector<8x32xf32>, vector<32x32xf32>, vector<8x32xf32> -> vector<8x32xf32>
    %60 = arith.mulf %41, %59 : vector<8x32xf32>
    %c2_57 = arith.constant 2 : index
    %c0_58 = arith.constant 0 : index
    %c0_59 = arith.constant 0 : index
    %61 = vector.load %arg7[%c2_57, %c0_58, %c0_59] : memref<4x32x8xf32, #tpu.memory_space<vmem>>, vector<1x32x8xf32>
    %62 = vector.shape_cast %61 : vector<1x32x8xf32> to vector<32x8xf32>
    %cst_60 = arith.constant dense<0.000000e+00> : vector<8x8xf32>
    %63 = tpu.matmul %60, %62, %cst_60 {dimension_numbers = #tpu.dot_dimension_numbers<[1], [0], [0], [1], [0, 0, 1, 1], [], []>} : vector<8x32xf32>, vector<32x8xf32>, vector<8x8xf32> -> vector<8x8xf32>
    %64 = arith.addf %56, %63 : vector<8x8xf32>
    %c3_61 = arith.constant 3 : index
    %c0_62 = arith.constant 0 : index
    %c0_63 = arith.constant 0 : index
    %65 = vector.load %arg6[%c3_61, %c0_62, %c0_63] : memref<4x32x32xf32, #tpu.memory_space<vmem>>, vector<1x32x32xf32>
    %66 = vector.shape_cast %65 : vector<1x32x32xf32> to vector<32x32xf32>
    %cst_64 = arith.constant dense<0.000000e+00> : vector<8x32xf32>
    %67 = tpu.matmul %39, %66, %cst_64 {dimension_numbers = #tpu.dot_dimension_numbers<[1], [0], [0], [1], [0, 0, 1, 1], [], []>} : vector<8x32xf32>, vector<32x32xf32>, vector<8x32xf32> -> vector<8x32xf32>
    %68 = arith.mulf %41, %67 : vector<8x32xf32>
    %c3_65 = arith.constant 3 : index
    %c0_66 = arith.constant 0 : index
    %c0_67 = arith.constant 0 : index
    %69 = vector.load %arg7[%c3_65, %c0_66, %c0_67] : memref<4x32x8xf32, #tpu.memory_space<vmem>>, vector<1x32x8xf32>
    %70 = vector.shape_cast %69 : vector<1x32x8xf32> to vector<32x8xf32>
    %cst_68 = arith.constant dense<0.000000e+00> : vector<8x8xf32>
    %71 = tpu.matmul %68, %70, %cst_68 {dimension_numbers = #tpu.dot_dimension_numbers<[1], [0], [0], [1], [0, 0, 1, 1], [], []>} : vector<8x32xf32>, vector<32x8xf32>, vector<8x8xf32> -> vector<8x8xf32>
    %72 = arith.addf %64, %71 : vector<8x8xf32>
    %c0_69 = arith.constant 0 : index
    %c0_70 = arith.constant 0 : index
    %73 = vector.load %arg8[%c0_69, %c0_70] : memref<8x8xf32, #tpu.memory_space<vmem>>, vector<8x8xf32>
    tpu.vector_store %arg8[%c0_69, %c0_70], %72 {strides = array<i32>} : memref<8x8xf32, #tpu.memory_space<vmem>>, vector<8x8xf32>,
    return
  }
  func.func @transform_0(%arg0: i32) -> (i32, i32) {
    %c0_i32 = arith.constant 0 : i32
    %c0_i32_0 = arith.constant 0 : i32
    return %arg0, %c0_i32 : i32, i32
  }
  func.func @transform_1(%arg0: i32) -> (i32, i32) {
    %c0_i32 = arith.constant 0 : i32
    %c0_i32_0 = arith.constant 0 : i32
    %c0_i32_1 = arith.constant 0 : i32
    return %c0_i32, %c0_i32_0 : i32, i32
  }
  func.func @transform_2(%arg0: i32) -> (i32, i32) {
    %c0_i32 = arith.constant 0 : i32
    %c0_i32_0 = arith.constant 0 : i32
    %c0_i32_1 = arith.constant 0 : i32
    return %c0_i32, %c0_i32_0 : i32, i32
  }
  func.func @transform_3(%arg0: i32) -> (i32, i32, i32) {
    %c0_i32 = arith.constant 0 : i32
    %c0_i32_0 = arith.constant 0 : i32
    %c0_i32_1 = arith.constant 0 : i32
    %c0_i32_2 = arith.constant 0 : i32
    return %c0_i32, %c0_i32_0, %c0_i32_1 : i32, i32, i32
  }
  func.func @transform_4(%arg0: i32) -> (i32, i32, i32) {
    %c0_i32 = arith.constant 0 : i32
    %c0_i32_0 = arith.constant 0 : i32
    %c0_i32_1 = arith.constant 0 : i32
    %c0_i32_2 = arith.constant 0 : i32
    return %c0_i32, %c0_i32_0, %c0_i32_1 : i32, i32, i32
  }
  func.func @transform_5(%arg0: i32) -> (i32, i32, i32) {
    %c0_i32 = arith.constant 0 : i32
    %c0_i32_0 = arith.constant 0 : i32
    %c0_i32_1 = arith.constant 0 : i32
    %c0_i32_2 = arith.constant 0 : i32
    return %c0_i32, %c0_i32_0, %c0_i32_1 : i32, i32, i32
  }
  func.func @transform_6(%arg0: i32) -> (i32, i32, i32) {
    %c0_i32 = arith.constant 0 : i32
    %c0_i32_0 = arith.constant 0 : i32
    %c0_i32_1 = arith.constant 0 : i32
    %c0_i32_2 = arith.constant 0 : i32
    return %c0_i32, %c0_i32_0, %c0_i32_1 : i32, i32, i32
  }
  func.func @transform_7(%arg0: i32) -> (i32, i32) {
    %c0_i32 = arith.constant 0 : i32
    %c0_i32_0 = arith.constant 0 : i32
    return %arg0, %c0_i32 : i32, i32
  }
}

</mosaic_0001>

<llo_original>
// kernel: forward.1
$region0: #{forward.1}
  #allocation0 [shape = 'u32[]', space=smem, size = 0x4, offset = 0x4, fixed_abs, tag = 'smem constant byte address 0x4 - core index']
  #allocation1 [shape = 'u32[144,128]{1,0:T(1,128)}', space=vmem, size = 0x12000, scoped, tag = 'internal scratch']
  %s0 = inlined_call_operand.vmem [shape: f32[8,8], index: 0, kind: input, shape index: {}]
  %s1 = inlined_call_operand.hbm [shape: f32[32,32], index: 1, kind: input, shape index: {}]
  %s2 = inlined_call_operand.hbm [shape: f32[32,32], index: 2, kind: input, shape index: {}]
  %s3 = inlined_call_operand.hbm [shape: f32[4,8,32], index: 3, kind: input, shape index: {}]
  %s4 = inlined_call_operand.hbm [shape: f32[4,8,32], index: 4, kind: input, shape index: {}]
  %s5 = inlined_call_operand.hbm [shape: f32[4,32,32], index: 5, kind: input, shape index: {}]
  %s6 = inlined_call_operand.hbm [shape: f32[4,32,8], index: 6, kind: input, shape index: {}]
  %s7 = inlined_call_operand.vmem [shape: f32[8,8], index: 7, kind: output, shape index: {}]
  %s8 = sld [smem:[#allocation0]]
  $region62: #{forward.1} parent=0
    _
  %s10 = ssub.s32 1, %s8
  %s11 = scalar_select 0, %s10, %s8
  $region1: #{forward.1} parent=0
    #allocation2 [shape = 'u8[16384]{0}', space=vmem, size = 0x4000, scoped, tag = 'input window, operand 1, single buffered']
    #allocation3 [shape = 's32[1]{0}', space=sflag, size = 0x4, scoped, tag = 'scoped memory for forward.1']
    #allocation4 [shape = 'u8[16384]{0}', space=vmem, size = 0x4000, scoped, tag = 'input window, operand 2, single buffered']
    #allocation5 [shape = 's32[1]{0}', space=sflag, size = 0x4, scoped, tag = 'scoped memory for forward.1']
    #allocation6 [shape = 'u8[16384]{0}', space=vmem, size = 0x4000, scoped, tag = 'input window, operand 3, single buffered']
    #allocation7 [shape = 'u8[16384]{0}', space=vmem, size = 0x4000, scoped, tag = 'input window, operand 4, single buffered']
    #allocation8 [shape = 's32[1]{0}', space=sflag, size = 0x4, scoped, tag = 'scoped memory for forward.1']
    #allocation9 [shape = 'u8[65536]{0}', space=vmem, size = 0x10000, scoped, tag = 'input window, operand 5, single buffered']
    #allocation10 [shape = 'u8[65536]{0}', space=vmem, size = 0x10000, scoped, tag = 'input window, operand 6, single buffered']
    #allocation11 [shape = 's32[1]{0}', space=sflag, size = 0x4, scoped, tag = 'scoped memory for forward.1']
    %12 = vsyncpa [#allocation3], 0
    %13 = vsyncpa [#allocation5], 0
    %14 = vsyncpa [#allocation8], 0
    %15 = vsyncpa [#allocation11], 0
    // Predicated region
    $region2: #{forward.1} parent=1 // pred_check
      _
    $region3: #{forward.1} parent=1 // pred_check_branch
      %17 = sbr.rel (0) target = $region5
    $region4: #{forward.1} parent=1 // pred_region
      _
    $region5: #{forward.1} parent=1 // pred_fallthru
      _
    // Predicated region
    $region6: #{forward.1} parent=1 // pred_check
      _
    $region7: #{forward.1} parent=1 // pred_check_branch
      %19 = sbr.rel (0) target = $region9
    $region8: #{forward.1} parent=1 // pred_region
      %s21 = ssub.s32 512, 512
      %22 = vsyncadd [#allocation3], %s21
      %s23 = sshll.u32 [#allocation2], 4
      %s24 = int_to_ptr.vmem [resolvable:$true] %s23
      %29 = dma.hbm_to_vmem [thread:$0]  %s1, 512, %s24, [#allocation3], 128, 128, 8
    $region9: #{forward.1} parent=1 // pred_fallthru
      _
    // Predicated region
    $region10: #{forward.1} parent=1 // pred_check
      _
    $region11: #{forward.1} parent=1 // pred_check_branch
      %31 = sbr.rel (0) target = $region13
    $region12: #{forward.1} parent=1 // pred_region
      %s33 = ssub.s32 512, 512
      %34 = vsyncadd [#allocation5], %s33
      %s35 = sshll.u32 [#allocation4], 4
      %s36 = int_to_ptr.vmem [resolvable:$true] %s35
      %41 = dma.hbm_to_vmem [thread:$0]  %s2, 512, %s36, [#allocation5], 128, 128, 8
    $region13: #{forward.1} parent=1 // pred_fallthru
      _
    // Predicated region
    $region14: #{forward.1} parent=1 // pred_check
      _
    $region15: #{forward.1} parent=1 // pred_check_branch
      %43 = sbr.rel (0) target = $region17
    $region16: #{forward.1} parent=1 // pred_region
      %s45 = ssub.s32 512, 512
      %46 = vsyncadd [#allocation5], %s45
      %s47 = sshll.u32 [#allocation6], 4
      %s48 = int_to_ptr.vmem [resolvable:$true] %s47
      %53 = dma.hbm_to_vmem [thread:$0]  %s3, 512, %s48, [#allocation5], 128, 128, 8
    $region17: #{forward.1} parent=1 // pred_fallthru
      _
    // Predicated region
    $region18: #{forward.1} parent=1 // pred_check
      _
    $region19: #{forward.1} parent=1 // pred_check_branch
      %55 = sbr.rel (0) target = $region21
    $region20: #{forward.1} parent=1 // pred_region
      %s57 = ssub.s32 512, 512
      %58 = vsyncadd [#allocation8], %s57
      %s59 = sshll.u32 [#allocation7], 4
      %s60 = int_to_ptr.vmem [resolvable:$true] %s59
      %65 = dma.hbm_to_vmem [thread:$0]  %s4, 512, %s60, [#allocation8], 128, 128, 8
    $region21: #{forward.1} parent=1 // pred_fallthru
      _
    // Predicated region
    $region22: #{forward.1} parent=1 // pred_check
      _
    $region23: #{forward.1} parent=1 // pred_check_branch
      %67 = sbr.rel (0) target = $region25
    $region24: #{forward.1} parent=1 // pred_region
      %s69 = ssub.s32 2048, 2048
      %70 = vsyncadd [#allocation8], %s69
      %s71 = sshll.u32 [#allocation9], 4
      %s72 = int_to_ptr.vmem [resolvable:$true] %s71
      %77 = dma.hbm_to_vmem [thread:$0]  %s5, 2048, %s72, [#allocation8], 128, 128, 8
    $region25: #{forward.1} parent=1 // pred_fallthru
      _
    // Predicated region
    $region26: #{forward.1} parent=1 // pred_check
      _
    $region27: #{forward.1} parent=1 // pred_check_branch
      %79 = sbr.rel (0) target = $region29
    $region28: #{forward.1} parent=1 // pred_region
      %s81 = ssub.s32 2048, 2048
      %82 = vsyncadd [#allocation11], %s81
      %s83 = sshll.u32 [#allocation10], 4
      %s84 = int_to_ptr.vmem [resolvable:$true] %s83
      %89 = dma.hbm_to_vmem [thread:$0]  %s6, 2048, %s84, [#allocation11], 128, 128, 8
    $region29: #{forward.1} parent=1 // pred_fallthru
      _
    // Predicated region
    $region30: #{forward.1} parent=1 // pred_check
      _
    $region31: #{forward.1} parent=1 // pred_check_branch
      %91 = sbr.rel (0) target = $region33
    $region32: #{forward.1} parent=1 // pred_region
      %92 = dma.done [#allocation3], 512
    $region33: #{forward.1} parent=1 // pred_fallthru
      _
    // Predicated region
    $region34: #{forward.1} parent=1 // pred_check
      _
    $region35: #{forward.1} parent=1 // pred_check_branch
      %94 = sbr.rel (0) target = $region37
    $region36: #{forward.1} parent=1 // pred_region
      %95 = dma.done [#allocation5], 512
    $region37: #{forward.1} parent=1 // pred_fallthru
      _
    // Predicated region
    $region38: #{forward.1} parent=1 // pred_check
      _
    $region39: #{forward.1} parent=1 // pred_check_branch
      %97 = sbr.rel (0) target = $region41
    $region40: #{forward.1} parent=1 // pred_region
      %98 = dma.done [#allocation5], 512
    $region41: #{forward.1} parent=1 // pred_fallthru
      _
    // Predicated region
    $region42: #{forward.1} parent=1 // pred_check
      _
    $region43: #{forward.1} parent=1 // pred_check_branch
      %100 = sbr.rel (0) target = $region45
    $region44: #{forward.1} parent=1 // pred_region
      %101 = dma.done [#allocation8], 512
    $region45: #{forward.1} parent=1 // pred_fallthru
      _
    // Predicated region
    $region46: #{forward.1} parent=1 // pred_check
      _
    $region47: #{forward.1} parent=1 // pred_check_branch
      %103 = sbr.rel (0) target = $region49
    $region48: #{forward.1} parent=1 // pred_region
      %104 = dma.done [#allocation8], 2048
    $region49: #{forward.1} parent=1 // pred_fallthru
      _
    // Predicated region
    $region50: #{forward.1} parent=1 // pred_check
      _
    $region51: #{forward.1} parent=1 // pred_check_branch
      %106 = sbr.rel (0) target = $region53
    $region52: #{forward.1} parent=1 // pred_region
      %107 = dma.done [#allocation11], 2048
    $region53: #{forward.1} parent=1 // pred_fallthru
      _
    %v108 = vld [vmem:[%s0] sm:$0xff]
    %v109 = vmul.f32 %v108, 0.5
    %v110 = vand.u32 2147483647, %v109
    %vm111 = vcmp.le.f32.partialorder %v110, 0.7853982
    %vm112 = vcmp.lt.s32.totalorder %v109, 0
    %v113 = vand.u32 %v109, 2139095040
    %v114 = vshrl.u32 %v113, 23
    %v115 = vsub.s32 %v114, 127
    %v116 = vand.u32 2147483647, %v109
    %v117 = vand.u32 %v116, 8388607
    %v118 = vor.u32 %v117, 8388608
    %v119 = vsub.s32 0, %v118
    %v120 = vadd.s32 %v115, 1
    %vm121 = vcmp.gt.s32.totalorder %v120, 0
    %v122 = vsel %vm121, %v120, 0
    %v123 = vshrl.u32 %v122, 5
    %v124 = vand.u32 %v122, 31
    %v125 = vsub.s32 32, %v124
    %v126 = vshrl.u32 683565275, %v125
    %v127 = vshll.u32 683565275, %v124
    %v128 = vshrl.u32 2475754826, %v125
    %v129 = vor.u32 %v127, %v128
    %v130 = vshll.u32 2475754826, %v124
    %v131 = vshrl.u32 2131351028, %v125
    %v132 = vor.u32 %v130, %v131
    %v133 = vshll.u32 2131351028, %v124
    %v134 = vshrl.u32 2102212464, %v125
    %v135 = vor.u32 %v133, %v134
    %v136 = vshll.u32 2102212464, %v124
    %v137 = vshrl.u32 920167782, %v125
    %v138 = vor.u32 %v136, %v137
    %v139 = vshll.u32 920167782, %v124
    %v140 = vshrl.u32 1326507024, %v125
    %v141 = vor.u32 %v139, %v140
    %vm142 = vcmp.lt.s32.totalorder %v123, 1
    %vm143 = vcmp.lt.s32.totalorder %v123, 2
    %vm144 = vcmp.lt.s32.totalorder %v123, 3
    %vm145 = vcmp.lt.s32.totalorder %v123, 4
    %v146 = vsel %vm142, %v126, %v129
    %v147 = vsel %vm145, %v135, 2102212464
    %v148 = vsel %vm144, %v132, %v147
    %v149 = vsel %vm143, %v146, %v148
    %v150 = vsel %vm142, %v129, %v132
    %v151 = vsel %vm145, %v138, 920167782
    %v152 = vsel %vm144, %v135, %v151
    %v153 = vsel %vm143, %v150, %v152
    %v154 = vsel %vm142, %v132, %v135
    %v155 = vsel %vm145, %v141, 1326507024
    %v156 = vsel %vm144, %v138, %v155
    %v157 = vsel %vm143, %v154, %v156
    %v158 = vshll.u32 %v118, 8
    %v159 = vmul.u32.u64.compose %v158, %v157
    %v160 = vextract.low.u32 %v159
    %v161 = vextract.high.u32 %v159
    %v162 = vmul.u32.u64.compose %v158, %v153
    %v163 = vextract.low.u32 %v162
    %v164 = vextract.high.u32 %v162
    %v165 = vmul.u32 %v158, %v149
    %v166 = vadd.s32 %v161, %v163
    %vm167 = vc.u32 %v161, %v163
    %v168 = vadd.s32 %v164, 1
    %v169 = vsel %vm167, %v168, %v164
    %v170 = vadd.s32 %v165, %v169
    %v171 = vadd.s32 %v170, 536870912
    %v172 = vshrl.u32 %v171, 30
    %v173 = vshll.u32 %v172, 30
    %v174 = vsub.s32 %v170, %v173
    %vm175 = vcmp.lt.s32.totalorder %v174, 0
    %v176 = vsub.s32 0, %v174
    %v177 = vsel %vm175, %v176, %v174
    %v178 = vclz %v177
    %v179 = vsub.s32 %v178, 2
    %vm180 = vcmp.gt.s32.totalorder 0, %v179
    %v181 = vsel %vm180, 0, %v179
    %v182 = vsub.s32 32, %v181
    %v183 = vshll.u32 %v174, %v181
    %v184 = vshrl.u32 %v166, %v182
    %v185 = vor.u32 %v183, %v184
    %v186 = vsub.s32 4294967266, %v181
    %v187 = vadd.s32 %v186, 127
    %v188 = vshll.u32 %v187, 23
    %v189 = vor.u32 4788187, %v188
    %v190 = vand.u32 2147483647, %v189
    %v192 = vcvt.s32.f32 %v185
    %v193 = vmul.f32 %v192, %v190
    %v194 = vxor.u32 %v193, 2147483648
    %v195 = vsel %vm112, %v194, %v193
    %v196 = vsub.s32 4, %v172
    %v197 = vsel %vm112, %v196, %v172
    %v198 = vsel %vm111, %v109, %v195
    %v199 = vsel %vm111, 0, %v197
    %v200 = vcosq.f32.pop %v198
    %v201 = vsinq.f32.pop %v198
    %vm202 = vweird.f32 %v109
    %v203 = vand.u32 %v199, 3
    %vm204 = vcmp.lt.s32.totalorder %v203, 2
    %vm205 = vcmp.eq.s32.totalorder %v203, 0
    %v206 = vxor.u32 %v201, 2147483648
    %v207 = vsel %vm205, %v200, %v206
    %vm208 = vcmp.eq.s32.totalorder %v203, 2
    %v209 = vxor.u32 %v200, 2147483648
    %v210 = vsel %vm208, %v209, %v201
    %v211 = vsel %vm204, %v207, %v210
    %v212 = vsel %vm202, nan, %v211
    %v213 = vand.u32 2147483647, %v109
    %vm214 = vcmp.le.f32.partialorder %v213, 0.7853982
    %vm215 = vcmp.lt.s32.totalorder %v109, 0
    %v216 = vand.u32 %v109, 2139095040
    %v217 = vshrl.u32 %v216, 23
    %v218 = vsub.s32 %v217, 127
    %v219 = vand.u32 2147483647, %v109
    %v220 = vand.u32 %v219, 8388607
    %v221 = vor.u32 %v220, 8388608
    %v222 = vsub.s32 0, %v221
    %v223 = vadd.s32 %v218, 1
    %vm224 = vcmp.gt.s32.totalorder %v223, 0
    %v225 = vsel %vm224, %v223, 0
    %v226 = vshrl.u32 %v225, 5
    %v227 = vand.u32 %v225, 31
    %v228 = vsub.s32 32, %v227
    %v229 = vshrl.u32 683565275, %v228
    %v230 = vshll.u32 683565275, %v227
    %v231 = vshrl.u32 2475754826, %v228
    %v232 = vor.u32 %v230, %v231
    %v233 = vshll.u32 2475754826, %v227
    %v234 = vshrl.u32 2131351028, %v228
    %v235 = vor.u32 %v233, %v234
    %v236 = vshll.u32 2131351028, %v227
    %v237 = vshrl.u32 2102212464, %v228
    %v238 = vor.u32 %v236, %v237
    %v239 = vshll.u32 2102212464, %v227
    %v240 = vshrl.u32 920167782, %v228
    %v241 = vor.u32 %v239, %v240
    %v242 = vshll.u32 920167782, %v227
    %v243 = vshrl.u32 1326507024, %v228
    %v244 = vor.u32 %v242, %v243
    %vm245 = vcmp.lt.s32.totalorder %v226, 1
    %vm246 = vcmp.lt.s32.totalorder %v226, 2
    %vm247 = vcmp.lt.s32.totalorder %v226, 3
    %vm248 = vcmp.lt.s32.totalorder %v226, 4
    %v249 = vsel %vm245, %v229, %v232
    %v250 = vsel %vm248, %v238, 2102212464
    %v251 = vsel %vm247, %v235, %v250
    %v252 = vsel %vm246, %v249, %v251
    %v253 = vsel %vm245, %v232, %v235
    %v254 = vsel %vm248, %v241, 920167782
    %v255 = vsel %vm247, %v238, %v254
    %v256 = vsel %vm246, %v253, %v255
    %v257 = vsel %vm245, %v235, %v238
    %v258 = vsel %vm248, %v244, 1326507024
    %v259 = vsel %vm247, %v241, %v258
    %v260 = vsel %vm246, %v257, %v259
    %v261 = vshll.u32 %v221, 8
    %v262 = vmul.u32.u64.compose %v261, %v260
    %v263 = vextract.low.u32 %v262
    %v264 = vextract.high.u32 %v262
    %v265 = vmul.u32.u64.compose %v261, %v256
    %v266 = vextract.low.u32 %v265
    %v267 = vextract.high.u32 %v265
    %v268 = vmul.u32 %v261, %v252
    %v269 = vadd.s32 %v264, %v266
    %vm270 = vc.u32 %v264, %v266
    %v271 = vadd.s32 %v267, 1
    %v272 = vsel %vm270, %v271, %v267
    %v273 = vadd.s32 %v268, %v272
    %v274 = vadd.s32 %v273, 536870912
    %v275 = vshrl.u32 %v274, 30
    %v276 = vshll.u32 %v275, 30
    %v277 = vsub.s32 %v273, %v276
    %vm278 = vcmp.lt.s32.totalorder %v277, 0
    %v279 = vsub.s32 0, %v277
    %v280 = vsel %vm278, %v279, %v277
    %v281 = vclz %v280
    %v282 = vsub.s32 %v281, 2
    %vm283 = vcmp.gt.s32.totalorder 0, %v282
    %v284 = vsel %vm283, 0, %v282
    %v285 = vsub.s32 32, %v284
    %v286 = vshll.u32 %v277, %v284
    %v287 = vshrl.u32 %v269, %v285
    %v288 = vor.u32 %v286, %v287
    %v289 = vsub.s32 4294967266, %v284
    %v290 = vadd.s32 %v289, 127
    %v291 = vshll.u32 %v290, 23
    %v292 = vor.u32 4788187, %v291
    %v293 = vand.u32 2147483647, %v292
    %v295 = vcvt.s32.f32 %v288
    %v296 = vmul.f32 %v295, %v293
    %v297 = vxor.u32 %v296, 2147483648
    %v298 = vsel %vm215, %v297, %v296
    %v299 = vsub.s32 4, %v275
    %v300 = vsel %vm215, %v299, %v275
    %v301 = vsel %vm214, %v109, %v298
    %v302 = vsel %vm214, 0, %v300
    %v303 = vcosq.f32.pop %v301
    %v304 = vsinq.f32.pop %v301
    %vm305 = vweird.f32 %v109
    %v306 = vadd.s32 %v302, 3
    %v307 = vand.u32 %v306, 3
    %vm308 = vcmp.lt.s32.totalorder %v307, 2
    %vm309 = vcmp.eq.s32.totalorder %v307, 0
    %v310 = vxor.u32 %v304, 2147483648
    %v311 = vsel %vm309, %v303, %v310
    %vm312 = vcmp.eq.s32.totalorder %v307, 2
    %v313 = vxor.u32 %v303, 2147483648
    %v314 = vsel %vm312, %v313, %v304
    %v315 = vsel %vm308, %v311, %v314
    %v316 = vsel %vm305, nan, %v315
    %v317 = vld [vmem:[#allocation6] sm:$0xff]
    %v318 = vld [vmem:[#allocation7] sm:$0xff]
    %vm319 = vcmask 64512
    %v321 = vsel %vm319, %v316, 0
    %323 = vmatprep.subr.mxu0 0.0
    %324 = vmatpush1.msra.mxu0 %v318
    %325 = vmatprep.subr.mxu0 0.0
    %326 = vmatpush1.msra.mxu0 0.0
    %327 = vmatprep.subr.mxu0 0.0
    %328 = vmatpush1.msra.mxu0 0.0
    %329 = vmatprep.subr.mxu0 0.0
    %330 = vmatpush1.msra.mxu0 0.0
    %331 = vmatprep.subr.mxu0 0.0
    %332 = vmatpush1.msra.mxu0 0.0
    %333 = vmatprep.subr.mxu0 0.0
    %334 = vmatpush1.msra.mxu0 0.0
    %335 = vmatprep.subr.mxu0 0.0
    %336 = vmatpush1.msra.mxu0 0.0
    %337 = vmatprep.subr.mxu0 0.0
    %338 = vmatpush1.msra.mxu0 0.0
    %339 = vmatprep.subr.mxu0 0.0
    %340 = vmatpush1.msra.mxu0 0.0
    %341 = vmatprep.subr.mxu0 0.0
    %342 = vmatpush1.msra.mxu0 0.0
    %343 = vmatprep.subr.mxu0 0.0
    %344 = vmatpush1.msra.mxu0 0.0
    %345 = vmatprep.subr.mxu0 0.0
    %346 = vmatpush1.msra.mxu0 0.0
    %347 = vmatprep.subr.mxu0 0.0
    %348 = vmatpush1.msra.mxu0 0.0
    %349 = vmatprep.subr.mxu0 0.0
    %350 = vmatpush1.msra.mxu0 0.0
    %351 = vmatprep.subr.mxu0 0.0
    %352 = vmatpush1.msra.mxu0 0.0
    %353 = vmatprep.subr.mxu0 0.0
    %354 = vmatpush1.msra.mxu0 0.0
    %355 = vmatprep.subr.mxu0 0.0
    %356 = vmatpush1.msra.mxu0 0.0
    %357 = vmatprep.subr.mxu0 0.0
    %358 = vmatpush1.msra.mxu0 0.0
    %359 = vmatprep.subr.mxu0 0.0
    %360 = vmatpush1.msra.mxu0 0.0
    %361 = vmatprep.subr.mxu0 0.0
    %362 = vmatpush1.msra.mxu0 0.0
    %363 = vmatprep.subr.mxu0 0.0
    %364 = vmatpush1.msra.mxu0 0.0
    %365 = vmatprep.subr.mxu0 0.0
    %366 = vmatpush1.msra.mxu0 0.0
    %367 = vmatprep.subr.mxu0 0.0
    %368 = vmatpush1.msra.mxu0 0.0
    %369 = vmatprep.subr.mxu0 0.0
    %370 = vmatpush1.msra.mxu0 0.0
    %371 = vmatprep.subr.mxu0 0.0
    %372 = vmatpush1.msra.mxu0 0.0
    %373 = vmatprep.subr.mxu0 0.0
    %374 = vmatpush1.msra.mxu0 0.0
    %375 = vmatprep.subr.mxu0 0.0
    %376 = vmatpush1.msra.mxu0 0.0
    %377 = vmatprep.subr.mxu0 0.0
    %378 = vmatpush1.msra.mxu0 0.0
    %379 = vmatprep.subr.mxu0 0.0
    %380 = vmatpush1.msra.mxu0 0.0
    %381 = vmatprep.subr.mxu0 0.0
    %382 = vmatpush1.msra.mxu0 0.0
    %383 = vmatprep.subr.mxu0 0.0
    %384 = vmatpush1.msra.mxu0 0.0
    %385 = vmatprep.subr.mxu0 0.0
    %386 = vmatpush1.msra.mxu0 0.0
    %387 = vmatprep.mubr.f32.mxu0 0.0
    %388 = vmatmul.mubr.f32.gmra.mrb[0].mxu0 %v321
    %v389 = vpop.f32.mrb[0].mxu0
    %v390 = vadd.f32 0.0, %v389
    %v391 = vpop.f32.mrb[0].mxu0
    %392 = vdwg.mxu0
    %v394 = vsel %vm319, %v212, 0
    %396 = vmatprep.subr.mxu0 0.0
    %397 = vmatpush1.msra.mxu0 %v317
    %398 = vmatprep.subr.mxu0 0.0
    %399 = vmatpush1.msra.mxu0 0.0
    %400 = vmatprep.subr.mxu0 0.0
    %401 = vmatpush1.msra.mxu0 0.0
    %402 = vmatprep.subr.mxu0 0.0
    %403 = vmatpush1.msra.mxu0 0.0
    %404 = vmatprep.subr.mxu0 0.0
    %405 = vmatpush1.msra.mxu0 0.0
    %406 = vmatprep.subr.mxu0 0.0
    %407 = vmatpush1.msra.mxu0 0.0
    %408 = vmatprep.subr.mxu0 0.0
    %409 = vmatpush1.msra.mxu0 0.0
    %410 = vmatprep.subr.mxu0 0.0
    %411 = vmatpush1.msra.mxu0 0.0
    %412 = vmatprep.subr.mxu0 0.0
    %413 = vmatpush1.msra.mxu0 0.0
    %414 = vmatprep.subr.mxu0 0.0
    %415 = vmatpush1.msra.mxu0 0.0
    %416 = vmatprep.subr.mxu0 0.0
    %417 = vmatpush1.msra.mxu0 0.0
    %418 = vmatprep.subr.mxu0 0.0
    %419 = vmatpush1.msra.mxu0 0.0
    %420 = vmatprep.subr.mxu0 0.0
    %421 = vmatpush1.msra.mxu0 0.0
    %422 = vmatprep.subr.mxu0 0.0
    %423 = vmatpush1.msra.mxu0 0.0
    %424 = vmatprep.subr.mxu0 0.0
    %425 = vmatpush1.msra.mxu0 0.0
    %426 = vmatprep.subr.mxu0 0.0
    %427 = vmatpush1.msra.mxu0 0.0
    %428 = vmatprep.subr.mxu0 0.0
    %429 = vmatpush1.msra.mxu0 0.0
    %430 = vmatprep.subr.mxu0 0.0
    %431 = vmatpush1.msra.mxu0 0.0
    %432 = vmatprep.subr.mxu0 0.0
    %433 = vmatpush1.msra.mxu0 0.0
    %434 = vmatprep.subr.mxu0 0.0
    %435 = vmatpush1.msra.mxu0 0.0
    %436 = vmatprep.subr.mxu0 0.0
    %437 = vmatpush1.msra.mxu0 0.0
    %438 = vmatprep.subr.mxu0 0.0
    %439 = vmatpush1.msra.mxu0 0.0
    %440 = vmatprep.subr.mxu0 0.0
    %441 = vmatpush1.msra.mxu0 0.0
    %442 = vmatprep.subr.mxu0 0.0
    %443 = vmatpush1.msra.mxu0 0.0
    %444 = vmatprep.subr.mxu0 0.0
    %445 = vmatpush1.msra.mxu0 0.0
    %446 = vmatprep.subr.mxu0 0.0
    %447 = vmatpush1.msra.mxu0 0.0
    %448 = vmatprep.subr.mxu0 0.0
    %449 = vmatpush1.msra.mxu0 0.0
    %450 = vmatprep.subr.mxu0 0.0
    %451 = vmatpush1.msra.mxu0 0.0
    %452 = vmatprep.subr.mxu0 0.0
    %453 = vmatpush1.msra.mxu0 0.0
    %454 = vmatprep.subr.mxu0 0.0
    %455 = vmatpush1.msra.mxu0 0.0
    %456 = vmatprep.subr.mxu0 0.0
    %457 = vmatpush1.msra.mxu0 0.0
    %458 = vmatprep.subr.mxu0 0.0
    %459 = vmatpush1.msra.mxu0 0.0
    %460 = vmatprep.mubr.f32.mxu0 0.0
    %461 = vmatmul.mubr.f32.gmra.mrb[0].mxu0 %v394
    %v462 = vpop.f32.mrb[0].mxu0
    %v463 = vadd.f32 %v390, %v462
    %v464 = vpop.f32.mrb[0].mxu0
    %465 = vdwg.mxu0
    %s466 = scalar_lea.vmem [#allocation6], 8
    %v467 = vld [vmem:[%s466] sm:$0xff]
    %s468 = scalar_lea.vmem [#allocation7], 8
    %v469 = vld [vmem:[%s468] sm:$0xff]
    %470 = vmatprep.subr.mxu0 0.0
    %471 = vmatpush1.msra.mxu0 %v469
    %472 = vmatprep.subr.mxu0 0.0
    %473 = vmatpush1.msra.mxu0 0.0
    %474 = vmatprep.subr.mxu0 0.0
    %475 = vmatpush1.msra.mxu0 0.0
    %476 = vmatprep.subr.mxu0 0.0
    %477 = vmatpush1.msra.mxu0 0.0
    %478 = vmatprep.subr.mxu0 0.0
    %479 = vmatpush1.msra.mxu0 0.0
    %480 = vmatprep.subr.mxu0 0.0
    %481 = vmatpush1.msra.mxu0 0.0
    %482 = vmatprep.subr.mxu0 0.0
    %483 = vmatpush1.msra.mxu0 0.0
    %484 = vmatprep.subr.mxu0 0.0
    %485 = vmatpush1.msra.mxu0 0.0
    %486 = vmatprep.subr.mxu0 0.0
    %487 = vmatpush1.msra.mxu0 0.0
    %488 = vmatprep.subr.mxu0 0.0
    %489 = vmatpush1.msra.mxu0 0.0
    %490 = vmatprep.subr.mxu0 0.0
    %491 = vmatpush1.msra.mxu0 0.0
    %492 = vmatprep.subr.mxu0 0.0
    %493 = vmatpush1.msra.mxu0 0.0
    %494 = vmatprep.subr.mxu0 0.0
    %495 = vmatpush1.msra.mxu0 0.0
    %496 = vmatprep.subr.mxu0 0.0
    %497 = vmatpush1.msra.mxu0 0.0
    %498 = vmatprep.subr.mxu0 0.0
    %499 = vmatpush1.msra.mxu0 0.0
    %500 = vmatprep.subr.mxu0 0.0
    %501 = vmatpush1.msra.mxu0 0.0
    %502 = vmatprep.subr.mxu0 0.0
    %503 = vmatpush1.msra.mxu0 0.0
    %504 = vmatprep.subr.mxu0 0.0
    %505 = vmatpush1.msra.mxu0 0.0
    %506 = vmatprep.subr.mxu0 0.0
    %507 = vmatpush1.msra.mxu0 0.0
    %508 = vmatprep.subr.mxu0 0.0
    %509 = vmatpush1.msra.mxu0 0.0
    %510 = vmatprep.subr.mxu0 0.0
    %511 = vmatpush1.msra.mxu0 0.0
    %512 = vmatprep.subr.mxu0 0.0
    %513 = vmatpush1.msra.mxu0 0.0
    %514 = vmatprep.subr.mxu0 0.0
    %515 = vmatpush1.msra.mxu0 0.0
    %516 = vmatprep.subr.mxu0 0.0
    %517 = vmatpush1.msra.mxu0 0.0
    %518 = vmatprep.subr.mxu0 0.0
    %519 = vmatpush1.msra.mxu0 0.0
    %520 = vmatprep.subr.mxu0 0.0
    %521 = vmatpush1.msra.mxu0 0.0
    %522 = vmatprep.subr.mxu0 0.0
    %523 = vmatpush1.msra.mxu0 0.0
    %524 = vmatprep.subr.mxu0 0.0
    %525 = vmatpush1.msra.mxu0 0.0
    %526 = vmatprep.subr.mxu0 0.0
    %527 = vmatpush1.msra.mxu0 0.0
    %528 = vmatprep.subr.mxu0 0.0
    %529 = vmatpush1.msra.mxu0 0.0
    %530 = vmatprep.subr.mxu0 0.0
    %531 = vmatpush1.msra.mxu0 0.0
    %532 = vmatprep.subr.mxu0 0.0
    %533 = vmatpush1.msra.mxu0 0.0
    %534 = vmatprep.mubr.f32.mxu0 0.0
    %535 = vmatmul.mubr.f32.gmra.mrb[0].mxu0 %v321
    %v536 = vpop.f32.mrb[0].mxu0
    %v537 = vadd.f32 0.0, %v536
    %v538 = vpop.f32.mrb[0].mxu0
    %539 = vdwg.mxu0
    %540 = vmatprep.subr.mxu0 0.0
    %541 = vmatpush1.msra.mxu0 %v467
    %542 = vmatprep.subr.mxu0 0.0
    %543 = vmatpush1.msra.mxu0 0.0
    %544 = vmatprep.subr.mxu0 0.0
    %545 = vmatpush1.msra.mxu0 0.0
    %546 = vmatprep.subr.mxu0 0.0
    %547 = vmatpush1.msra.mxu0 0.0
    %548 = vmatprep.subr.mxu0 0.0
    %549 = vmatpush1.msra.mxu0 0.0
    %550 = vmatprep.subr.mxu0 0.0
    %551 = vmatpush1.msra.mxu0 0.0
    %552 = vmatprep.subr.mxu0 0.0
    %553 = vmatpush1.msra.mxu0 0.0
    %554 = vmatprep.subr.mxu0 0.0
    %555 = vmatpush1.msra.mxu0 0.0
    %556 = vmatprep.subr.mxu0 0.0
    %557 = vmatpush1.msra.mxu0 0.0
    %558 = vmatprep.subr.mxu0 0.0
    %559 = vmatpush1.msra.mxu0 0.0
    %560 = vmatprep.subr.mxu0 0.0
    %561 = vmatpush1.msra.mxu0 0.0
    %562 = vmatprep.subr.mxu0 0.0
    %563 = vmatpush1.msra.mxu0 0.0
    %564 = vmatprep.subr.mxu0 0.0
    %565 = vmatpush1.msra.mxu0 0.0
    %566 = vmatprep.subr.mxu0 0.0
    %567 = vmatpush1.msra.mxu0 0.0
    %568 = vmatprep.subr.mxu0 0.0
    %569 = vmatpush1.msra.mxu0 0.0
    %570 = vmatprep.subr.mxu0 0.0
    %571 = vmatpush1.msra.mxu0 0.0
    %572 = vmatprep.subr.mxu0 0.0
    %573 = vmatpush1.msra.mxu0 0.0
    %574 = vmatprep.subr.mxu0 0.0
    %575 = vmatpush1.msra.mxu0 0.0
    %576 = vmatprep.subr.mxu0 0.0
    %577 = vmatpush1.msra.mxu0 0.0
    %578 = vmatprep.subr.mxu0 0.0
    %579 = vmatpush1.msra.mxu0 0.0
    %580 = vmatprep.subr.mxu0 0.0
    %581 = vmatpush1.msra.mxu0 0.0
    %582 = vmatprep.subr.mxu0 0.0
    %583 = vmatpush1.msra.mxu0 0.0
    %584 = vmatprep.subr.mxu0 0.0
    %585 = vmatpush1.msra.mxu0 0.0
    %586 = vmatprep.subr.mxu0 0.0
    %587 = vmatpush1.msra.mxu0 0.0
    %588 = vmatprep.subr.mxu0 0.0
    %589 = vmatpush1.msra.mxu0 0.0
    %590 = vmatprep.subr.mxu0 0.0
    %591 = vmatpush1.msra.mxu0 0.0
    %592 = vmatprep.subr.mxu0 0.0
    %593 = vmatpush1.msra.mxu0 0.0
    %594 = vmatprep.subr.mxu0 0.0
    %595 = vmatpush1.msra.mxu0 0.0
    %596 = vmatprep.subr.mxu0 0.0
    %597 = vmatpush1.msra.mxu0 0.0
    %598 = vmatprep.subr.mxu0 0.0
    %599 = vmatpush1.msra.mxu0 0.0
    %600 = vmatprep.subr.mxu0 0.0
    %601 = vmatpush1.msra.mxu0 0.0
    %602 = vmatprep.subr.mxu0 0.0
    %603 = vmatpush1.msra.mxu0 0.0
    %604 = vmatprep.mubr.f32.mxu0 0.0
    %605 = vmatmul.mubr.f32.gmra.mrb[0].mxu0 %v394
    %v606 = vpop.f32.mrb[0].mxu0
    %v607 = vadd.f32 %v537, %v606
    %v608 = vpop.f32.mrb[0].mxu0
    %609 = vdwg.mxu0
    %v610 = vmul.f32 %v463, %v607
    %s611 = scalar_lea.vmem [#allocation6], 16
    %v612 = vld [vmem:[%s611] sm:$0xff]
    %s613 = scalar_lea.vmem [#allocation7], 16
    %v614 = vld [vmem:[%s613] sm:$0xff]
    %615 = vmatprep.subr.mxu0 0.0
    %616 = vmatpush1.msra.mxu0 %v614
    %617 = vmatprep.subr.mxu0 0.0
    %618 = vmatpush1.msra.mxu0 0.0
    %619 = vmatprep.subr.mxu0 0.0
    %620 = vmatpush1.msra.mxu0 0.0
    %621 = vmatprep.subr.mxu0 0.0
    %622 = vmatpush1.msra.mxu0 0.0
    %623 = vmatprep.subr.mxu0 0.0
    %624 = vmatpush1.msra.mxu0 0.0
    %625 = vmatprep.subr.mxu0 0.0
    %626 = vmatpush1.msra.mxu0 0.0
    %627 = vmatprep.subr.mxu0 0.0
    %628 = vmatpush1.msra.mxu0 0.0
    %629 = vmatprep.subr.mxu0 0.0
    %630 = vmatpush1.msra.mxu0 0.0
    %631 = vmatprep.subr.mxu0 0.0
    %632 = vmatpush1.msra.mxu0 0.0
    %633 = vmatprep.subr.mxu0 0.0
    %634 = vmatpush1.msra.mxu0 0.0
    %635 = vmatprep.subr.mxu0 0.0
    %636 = vmatpush1.msra.mxu0 0.0
    %637 = vmatprep.subr.mxu0 0.0
    %638 = vmatpush1.msra.mxu0 0.0
    %639 = vmatprep.subr.mxu0 0.0
    %640 = vmatpush1.msra.mxu0 0.0
    %641 = vmatprep.subr.mxu0 0.0
    %642 = vmatpush1.msra.mxu0 0.0
    %643 = vmatprep.subr.mxu0 0.0
    %644 = vmatpush1.msra.mxu0 0.0
    %645 = vmatprep.subr.mxu0 0.0
    %646 = vmatpush1.msra.mxu0 0.0
    %647 = vmatprep.subr.mxu0 0.0
    %648 = vmatpush1.msra.mxu0 0.0
    %649 = vmatprep.subr.mxu0 0.0
    %650 = vmatpush1.msra.mxu0 0.0
    %651 = vmatprep.subr.mxu0 0.0
    %652 = vmatpush1.msra.mxu0 0.0
    %653 = vmatprep.subr.mxu0 0.0
    %654 = vmatpush1.msra.mxu0 0.0
    %655 = vmatprep.subr.mxu0 0.0
    %656 = vmatpush1.msra.mxu0 0.0
    %657 = vmatprep.subr.mxu0 0.0
    %658 = vmatpush1.msra.mxu0 0.0
    %659 = vmatprep.subr.mxu0 0.0
    %660 = vmatpush1.msra.mxu0 0.0
    %661 = vmatprep.subr.mxu0 0.0
    %662 = vmatpush1.msra.mxu0 0.0
    %663 = vmatprep.subr.mxu0 0.0
    %664 = vmatpush1.msra.mxu0 0.0
    %665 = vmatprep.subr.mxu0 0.0
    %666 = vmatpush1.msra.mxu0 0.0
    %667 = vmatprep.subr.mxu0 0.0
    %668 = vmatpush1.msra.mxu0 0.0
    %669 = vmatprep.subr.mxu0 0.0
    %670 = vmatpush1.msra.mxu0 0.0
    %671 = vmatprep.subr.mxu0 0.0
    %672 = vmatpush1.msra.mxu0 0.0
    %673 = vmatprep.subr.mxu0 0.0
    %674 = vmatpush1.msra.mxu0 0.0
    %675 = vmatprep.subr.mxu0 0.0
    %676 = vmatpush1.msra.mxu0 0.0
    %677 = vmatprep.subr.mxu0 0.0
    %678 = vmatpush1.msra.mxu0 0.0
    %679 = vmatprep.mubr.f32.mxu0 0.0
    %680 = vmatmul.mubr.f32.gmra.mrb[0].mxu0 %v321
    %v681 = vpop.f32.mrb[0].mxu0
    %v682 = vadd.f32 0.0, %v681
    %v683 = vpop.f32.mrb[0].mxu0
    %684 = vdwg.mxu0
    %685 = vmatprep.subr.mxu0 0.0
    %686 = vmatpush1.msra.mxu0 %v612
    %687 = vmatprep.subr.mxu0 0.0
    %688 = vmatpush1.msra.mxu0 0.0
    %689 = vmatprep.subr.mxu0 0.0
    %690 = vmatpush1.msra.mxu0 0.0
    %691 = vmatprep.subr.mxu0 0.0
    %692 = vmatpush1.msra.mxu0 0.0
    %693 = vmatprep.subr.mxu0 0.0
    %694 = vmatpush1.msra.mxu0 0.0
    %695 = vmatprep.subr.mxu0 0.0
    %696 = vmatpush1.msra.mxu0 0.0
    %697 = vmatprep.subr.mxu0 0.0
    %698 = vmatpush1.msra.mxu0 0.0
    %699 = vmatprep.subr.mxu0 0.0
    %700 = vmatpush1.msra.mxu0 0.0
    %701 = vmatprep.subr.mxu0 0.0
    %702 = vmatpush1.msra.mxu0 0.0
    %703 = vmatprep.subr.mxu0 0.0
    %704 = vmatpush1.msra.mxu0 0.0
    %705 = vmatprep.subr.mxu0 0.0
    %706 = vmatpush1.msra.mxu0 0.0
    %707 = vmatprep.subr.mxu0 0.0
    %708 = vmatpush1.msra.mxu0 0.0
    %709 = vmatprep.subr.mxu0 0.0
    %710 = vmatpush1.msra.mxu0 0.0
    %711 = vmatprep.subr.mxu0 0.0
    %712 = vmatpush1.msra.mxu0 0.0
    %713 = vmatprep.subr.mxu0 0.0
    %714 = vmatpush1.msra.mxu0 0.0
    %715 = vmatprep.subr.mxu0 0.0
    %716 = vmatpush1.msra.mxu0 0.0
    %717 = vmatprep.subr.mxu0 0.0
    %718 = vmatpush1.msra.mxu0 0.0
    %719 = vmatprep.subr.mxu0 0.0
    %720 = vmatpush1.msra.mxu0 0.0
    %721 = vmatprep.subr.mxu0 0.0
    %722 = vmatpush1.msra.mxu0 0.0
    %723 = vmatprep.subr.mxu0 0.0
    %724 = vmatpush1.msra.mxu0 0.0
    %725 = vmatprep.subr.mxu0 0.0
    %726 = vmatpush1.msra.mxu0 0.0
    %727 = vmatprep.subr.mxu0 0.0
    %728 = vmatpush1.msra.mxu0 0.0
    %729 = vmatprep.subr.mxu0 0.0
    %730 = vmatpush1.msra.mxu0 0.0
    %731 = vmatprep.subr.mxu0 0.0
    %732 = vmatpush1.msra.mxu0 0.0
    %733 = vmatprep.subr.mxu0 0.0
    %734 = vmatpush1.msra.mxu0 0.0
    %735 = vmatprep.subr.mxu0 0.0
    %736 = vmatpush1.msra.mxu0 0.0
    %737 = vmatprep.subr.mxu0 0.0
    %738 = vmatpush1.msra.mxu0 0.0
    %739 = vmatprep.subr.mxu0 0.0
    %740 = vmatpush1.msra.mxu0 0.0
    %741 = vmatprep.subr.mxu0 0.0
    %742 = vmatpush1.msra.mxu0 0.0
    %743 = vmatprep.subr.mxu0 0.0
    %744 = vmatpush1.msra.mxu0 0.0
    %745 = vmatprep.subr.mxu0 0.0
    %746 = vmatpush1.msra.mxu0 0.0
    %747 = vmatprep.subr.mxu0 0.0
    %748 = vmatpush1.msra.mxu0 0.0
    %749 = vmatprep.mubr.f32.mxu0 0.0
    %750 = vmatmul.mubr.f32.gmra.mrb[0].mxu0 %v394
    %v751 = vpop.f32.mrb[0].mxu0
    %v752 = vadd.f32 %v682, %v751
    %v753 = vpop.f32.mrb[0].mxu0
    %754 = vdwg.mxu0
    %v755 = vmul.f32 %v610, %v752
    %s756 = scalar_lea.vmem [#allocation6], 24
    %v757 = vld [vmem:[%s756] sm:$0xff]
    %s758 = scalar_lea.vmem [#allocation7], 24
    %v759 = vld [vmem:[%s758] sm:$0xff]
    %760 = vmatprep.subr.mxu0 0.0
    %761 = vmatpush1.msra.mxu0 %v759
    %762 = vmatprep.subr.mxu0 0.0
    %763 = vmatpush1.msra.mxu0 0.0
    %764 = vmatprep.subr.mxu0 0.0
    %765 = vmatpush1.msra.mxu0 0.0
    %766 = vmatprep.subr.mxu0 0.0
    %767 = vmatpush1.msra.mxu0 0.0
    %768 = vmatprep.subr.mxu0 0.0
    %769 = vmatpush1.msra.mxu0 0.0
    %770 = vmatprep.subr.mxu0 0.0
    %771 = vmatpush1.msra.mxu0 0.0
    %772 = vmatprep.subr.mxu0 0.0
    %773 = vmatpush1.msra.mxu0 0.0
    %774 = vmatprep.subr.mxu0 0.0
    %775 = vmatpush1.msra.mxu0 0.0
    %776 = vmatprep.subr.mxu0 0.0
    %777 = vmatpush1.msra.mxu0 0.0
    %778 = vmatprep.subr.mxu0 0.0
    %779 = vmatpush1.msra.mxu0 0.0
    %780 = vmatprep.subr.mxu0 0.0
    %781 = vmatpush1.msra.mxu0 0.0
    %782 = vmatprep.subr.mxu0 0.0
    %783 = vmatpush1.msra.mxu0 0.0
    %784 = vmatprep.subr.mxu0 0.0
    %785 = vmatpush1.msra.mxu0 0.0
    %786 = vmatprep.subr.mxu0 0.0
    %787 = vmatpush1.msra.mxu0 0.0
    %788 = vmatprep.subr.mxu0 0.0
    %789 = vmatpush1.msra.mxu0 0.0
    %790 = vmatprep.subr.mxu0 0.0
    %791 = vmatpush1.msra.mxu0 0.0
    %792 = vmatprep.subr.mxu0 0.0
    %793 = vmatpush1.msra.mxu0 0.0
    %794 = vmatprep.subr.mxu0 0.0
    %795 = vmatpush1.msra.mxu0 0.0
    %796 = vmatprep.subr.mxu0 0.0
    %797 = vmatpush1.msra.mxu0 0.0
    %798 = vmatprep.subr.mxu0 0.0
    %799 = vmatpush1.msra.mxu0 0.0
    %800 = vmatprep.subr.mxu0 0.0
    %801 = vmatpush1.msra.mxu0 0.0
    %802 = vmatprep.subr.mxu0 0.0
    %803 = vmatpush1.msra.mxu0 0.0
    %804 = vmatprep.subr.mxu0 0.0
    %805 = vmatpush1.msra.mxu0 0.0
    %806 = vmatprep.subr.mxu0 0.0
    %807 = vmatpush1.msra.mxu0 0.0
    %808 = vmatprep.subr.mxu0 0.0
    %809 = vmatpush1.msra.mxu0 0.0
    %810 = vmatprep.subr.mxu0 0.0
    %811 = vmatpush1.msra.mxu0 0.0
    %812 = vmatprep.subr.mxu0 0.0
    %813 = vmatpush1.msra.mxu0 0.0
    %814 = vmatprep.subr.mxu0 0.0
    %815 = vmatpush1.msra.mxu0 0.0
    %816 = vmatprep.subr.mxu0 0.0
    %817 = vmatpush1.msra.mxu0 0.0
    %818 = vmatprep.subr.mxu0 0.0
    %819 = vmatpush1.msra.mxu0 0.0
    %820 = vmatprep.subr.mxu0 0.0
    %821 = vmatpush1.msra.mxu0 0.0
    %822 = vmatprep.subr.mxu0 0.0
    %823 = vmatpush1.msra.mxu0 0.0
    %824 = vmatprep.mubr.f32.mxu0 0.0
    %825 = vmatmul.mubr.f32.gmra.mrb[0].mxu0 %v321
    %v826 = vpop.f32.mrb[0].mxu0
    %v827 = vadd.f32 0.0, %v826
    %v828 = vpop.f32.mrb[0].mxu0
    %829 = vdwg.mxu0
    %830 = vmatprep.subr.mxu0 0.0
    %831 = vmatpush1.msra.mxu0 %v757
    %832 = vmatprep.subr.mxu0 0.0
    %833 = vmatpush1.msra.mxu0 0.0
    %834 = vmatprep.subr.mxu0 0.0
    %835 = vmatpush1.msra.mxu0 0.0
    %836 = vmatprep.subr.mxu0 0.0
    %837 = vmatpush1.msra.mxu0 0.0
    %838 = vmatprep.subr.mxu0 0.0
    %839 = vmatpush1.msra.mxu0 0.0
    %840 = vmatprep.subr.mxu0 0.0
    %841 = vmatpush1.msra.mxu0 0.0
    %842 = vmatprep.subr.mxu0 0.0
    %843 = vmatpush1.msra.mxu0 0.0
    %844 = vmatprep.subr.mxu0 0.0
    %845 = vmatpush1.msra.mxu0 0.0
    %846 = vmatprep.subr.mxu0 0.0
    %847 = vmatpush1.msra.mxu0 0.0
    %848 = vmatprep.subr.mxu0 0.0
    %849 = vmatpush1.msra.mxu0 0.0
    %850 = vmatprep.subr.mxu0 0.0
    %851 = vmatpush1.msra.mxu0 0.0
    %852 = vmatprep.subr.mxu0 0.0
    %853 = vmatpush1.msra.mxu0 0.0
    %854 = vmatprep.subr.mxu0 0.0
    %855 = vmatpush1.msra.mxu0 0.0
    %856 = vmatprep.subr.mxu0 0.0
    %857 = vmatpush1.msra.mxu0 0.0
    %858 = vmatprep.subr.mxu0 0.0
    %859 = vmatpush1.msra.mxu0 0.0
    %860 = vmatprep.subr.mxu0 0.0
    %861 = vmatpush1.msra.mxu0 0.0
    %862 = vmatprep.subr.mxu0 0.0
    %863 = vmatpush1.msra.mxu0 0.0
    %864 = vmatprep.subr.mxu0 0.0
    %865 = vmatpush1.msra.mxu0 0.0
    %866 = vmatprep.subr.mxu0 0.0
    %867 = vmatpush1.msra.mxu0 0.0
    %868 = vmatprep.subr.mxu0 0.0
    %869 = vmatpush1.msra.mxu0 0.0
    %870 = vmatprep.subr.mxu0 0.0
    %871 = vmatpush1.msra.mxu0 0.0
    %872 = vmatprep.subr.mxu0 0.0
    %873 = vmatpush1.msra.mxu0 0.0
    %874 = vmatprep.subr.mxu0 0.0
    %875 = vmatpush1.msra.mxu0 0.0
    %876 = vmatprep.subr.mxu0 0.0
    %877 = vmatpush1.msra.mxu0 0.0
    %878 = vmatprep.subr.mxu0 0.0
    %879 = vmatpush1.msra.mxu0 0.0
    %880 = vmatprep.subr.mxu0 0.0
    %881 = vmatpush1.msra.mxu0 0.0
    %882 = vmatprep.subr.mxu0 0.0
    %883 = vmatpush1.msra.mxu0 0.0
    %884 = vmatprep.subr.mxu0 0.0
    %885 = vmatpush1.msra.mxu0 0.0
    %886 = vmatprep.subr.mxu0 0.0
    %887 = vmatpush1.msra.mxu0 0.0
    %888 = vmatprep.subr.mxu0 0.0
    %889 = vmatpush1.msra.mxu0 0.0
    %890 = vmatprep.subr.mxu0 0.0
    %891 = vmatpush1.msra.mxu0 0.0
    %892 = vmatprep.subr.mxu0 0.0
    %893 = vmatpush1.msra.mxu0 0.0
    %894 = vmatprep.mubr.f32.mxu0 0.0
    %895 = vmatmul.mubr.f32.gmra.mrb[0].mxu0 %v394
    %v896 = vpop.f32.mrb[0].mxu0
    %v897 = vadd.f32 %v827, %v896
    %v898 = vpop.f32.mrb[0].mxu0
    %899 = vdwg.mxu0
    %v900 = vmul.f32 %v755, %v897
    %v901 = vld [vmem:[#allocation2] sm:$0xff]
    %v902 = vld [vmem:[#allocation2 + $0x8] sm:$0xff]
    %v903 = vld [vmem:[#allocation2 + $0x10] sm:$0xff]
    %v904 = vld [vmem:[#allocation2 + $0x18] sm:$0xff]
    %vm905 = vcmask 261120
    %v907 = vsel %vm905, %v900, 0
    %909 = vmatprep.subr.mxu0 0.0
    %910 = vmatpush1.msra.mxu0 %v901
    %911 = vmatprep.subr.mxu0 0.0
    %912 = vmatpush1.msra.mxu0 %v902
    %913 = vmatprep.subr.mxu0 0.0
    %914 = vmatpush1.msra.mxu0 %v903
    %915 = vmatprep.subr.mxu0 0.0
    %916 = vmatpush1.msra.mxu0 %v904
    %917 = vmatprep.subr.mxu0 0.0
    %918 = vmatpush1.msra.mxu0 0.0
    %919 = vmatprep.subr.mxu0 0.0
    %920 = vmatpush1.msra.mxu0 0.0
    %921 = vmatprep.subr.mxu0 0.0
    %922 = vmatpush1.msra.mxu0 0.0
    %923 = vmatprep.subr.mxu0 0.0
    %924 = vmatpush1.msra.mxu0 0.0
    %925 = vmatprep.subr.mxu0 0.0
    %926 = vmatpush1.msra.mxu0 0.0
    %927 = vmatprep.subr.mxu0 0.0
    %928 = vmatpush1.msra.mxu0 0.0
    %929 = vmatprep.subr.mxu0 0.0
    %930 = vmatpush1.msra.mxu0 0.0
    %931 = vmatprep.subr.mxu0 0.0
    %932 = vmatpush1.msra.mxu0 0.0
    %933 = vmatprep.subr.mxu0 0.0
    %934 = vmatpush1.msra.mxu0 0.0
    %935 = vmatprep.subr.mxu0 0.0
    %936 = vmatpush1.msra.mxu0 0.0
    %937 = vmatprep.subr.mxu0 0.0
    %938 = vmatpush1.msra.mxu0 0.0
    %939 = vmatprep.subr.mxu0 0.0
    %940 = vmatpush1.msra.mxu0 0.0
    %941 = vmatprep.subr.mxu0 0.0
    %942 = vmatpush1.msra.mxu0 0.0
    %943 = vmatprep.subr.mxu0 0.0
    %944 = vmatpush1.msra.mxu0 0.0
    %945 = vmatprep.subr.mxu0 0.0
    %946 = vmatpush1.msra.mxu0 0.0
    %947 = vmatprep.subr.mxu0 0.0
    %948 = vmatpush1.msra.mxu0 0.0
    %949 = vmatprep.subr.mxu0 0.0
    %950 = vmatpush1.msra.mxu0 0.0
    %951 = vmatprep.subr.mxu0 0.0
    %952 = vmatpush1.msra.mxu0 0.0
    %953 = vmatprep.subr.mxu0 0.0
    %954 = vmatpush1.msra.mxu0 0.0
    %955 = vmatprep.subr.mxu0 0.0
    %956 = vmatpush1.msra.mxu0 0.0
    %957 = vmatprep.subr.mxu0 0.0
    %958 = vmatpush1.msra.mxu0 0.0
    %959 = vmatprep.subr.mxu0 0.0
    %960 = vmatpush1.msra.mxu0 0.0
    %961 = vmatprep.subr.mxu0 0.0
    %962 = vmatpush1.msra.mxu0 0.0
    %963 = vmatprep.subr.mxu0 0.0
    %964 = vmatpush1.msra.mxu0 0.0
    %965 = vmatprep.subr.mxu0 0.0
    %966 = vmatpush1.msra.mxu0 0.0
    %967 = vmatprep.subr.mxu0 0.0
    %968 = vmatpush1.msra.mxu0 0.0
    %969 = vmatprep.subr.mxu0 0.0
    %970 = vmatpush1.msra.mxu0 0.0
    %971 = vmatprep.subr.mxu0 0.0
    %972 = vmatpush1.msra.mxu0 0.0
    %973 = vmatprep.mubr.f32.mxu0 0.0
    %974 = vmatmul.mubr.f32.gmra.mrb[0].mxu0 %v907
    %v975 = vpop.f32.mrb[0].mxu0
    %v976 = vadd.f32 0.0, %v975
    %v977 = vpop.f32.mrb[0].mxu0
    %978 = vdwg.mxu0
    %v979 = vld [vmem:[#allocation4] sm:$0xff]
    %v980 = vld [vmem:[#allocation4 + $0x8] sm:$0xff]
    %v981 = vld [vmem:[#allocation4 + $0x10] sm:$0xff]
    %v982 = vld [vmem:[#allocation4 + $0x18] sm:$0xff]
    %983 = vmatprep.subr.mxu0 0.0
    %984 = vmatpush1.msra.mxu0 %v979
    %985 = vmatprep.subr.mxu0 0.0
    %986 = vmatpush1.msra.mxu0 %v980
    %987 = vmatprep.subr.mxu0 0.0
    %988 = vmatpush1.msra.mxu0 %v981
    %989 = vmatprep.subr.mxu0 0.0
    %990 = vmatpush1.msra.mxu0 %v982
    %991 = vmatprep.subr.mxu0 0.0
    %992 = vmatpush1.msra.mxu0 0.0
    %993 = vmatprep.subr.mxu0 0.0
    %994 = vmatpush1.msra.mxu0 0.0
    %995 = vmatprep.subr.mxu0 0.0
    %996 = vmatpush1.msra.mxu0 0.0
    %997 = vmatprep.subr.mxu0 0.0
    %998 = vmatpush1.msra.mxu0 0.0
    %999 = vmatprep.subr.mxu0 0.0
    %1000 = vmatpush1.msra.mxu0 0.0
    %1001 = vmatprep.subr.mxu0 0.0
    %1002 = vmatpush1.msra.mxu0 0.0
    %1003 = vmatprep.subr.mxu0 0.0
    %1004 = vmatpush1.msra.mxu0 0.0
    %1005 = vmatprep.subr.mxu0 0.0
    %1006 = vmatpush1.msra.mxu0 0.0
    %1007 = vmatprep.subr.mxu0 0.0
    %1008 = vmatpush1.msra.mxu0 0.0
    %1009 = vmatprep.subr.mxu0 0.0
    %1010 = vmatpush1.msra.mxu0 0.0
    %1011 = vmatprep.subr.mxu0 0.0
    %1012 = vmatpush1.msra.mxu0 0.0
    %1013 = vmatprep.subr.mxu0 0.0
    %1014 = vmatpush1.msra.mxu0 0.0
    %1015 = vmatprep.subr.mxu0 0.0
    %1016 = vmatpush1.msra.mxu0 0.0
    %1017 = vmatprep.subr.mxu0 0.0
    %1018 = vmatpush1.msra.mxu0 0.0
    %1019 = vmatprep.subr.mxu0 0.0
    %1020 = vmatpush1.msra.mxu0 0.0
    %1021 = vmatprep.subr.mxu0 0.0
    %1022 = vmatpush1.msra.mxu0 0.0
    %1023 = vmatprep.subr.mxu0 0.0
    %1024 = vmatpush1.msra.mxu0 0.0
    %1025 = vmatprep.subr.mxu0 0.0
    %1026 = vmatpush1.msra.mxu0 0.0
    %1027 = vmatprep.subr.mxu0 0.0
    %1028 = vmatpush1.msra.mxu0 0.0
    %1029 = vmatprep.subr.mxu0 0.0
    %1030 = vmatpush1.msra.mxu0 0.0
    %1031 = vmatprep.subr.mxu0 0.0
    %1032 = vmatpush1.msra.mxu0 0.0
    %1033 = vmatprep.subr.mxu0 0.0
    %1034 = vmatpush1.msra.mxu0 0.0
    %1035 = vmatprep.subr.mxu0 0.0
    %1036 = vmatpush1.msra.mxu0 0.0
    %1037 = vmatprep.subr.mxu0 0.0
    %1038 = vmatpush1.msra.mxu0 0.0
    %1039 = vmatprep.subr.mxu0 0.0
    %1040 = vmatpush1.msra.mxu0 0.0
    %1041 = vmatprep.subr.mxu0 0.0
    %1042 = vmatpush1.msra.mxu0 0.0
    %1043 = vmatprep.subr.mxu0 0.0
    %1044 = vmatpush1.msra.mxu0 0.0
    %1045 = vmatprep.subr.mxu0 0.0
    %1046 = vmatpush1.msra.mxu0 0.0
    %1047 = vmatprep.mubr.f32.mxu0 0.0
    %1048 = vmatmul.mubr.f32.gmra.mrb[0].mxu0 %v907
    %v1049 = vpop.f32.mrb[0].mxu0
    %v1050 = vadd.f32 0.0, %v1049
    %v1051 = vpop.f32.mrb[0].mxu0
    %1052 = vdwg.mxu0
    %v1053 = vld [vmem:[#allocation9] sm:$0xff]
    %v1054 = vld [vmem:[#allocation9 + $0x8] sm:$0xff]
    %v1055 = vld [vmem:[#allocation9 + $0x10] sm:$0xff]
    %v1056 = vld [vmem:[#allocation9 + $0x18] sm:$0xff]
    %v1058 = vsel %vm905, %v976, 0
    %1060 = vmatprep.subr.mxu0 0.0
    %1061 = vmatpush1.msra.mxu0 %v1053
    %1062 = vmatprep.subr.mxu0 0.0
    %1063 = vmatpush1.msra.mxu0 %v1054
    %1064 = vmatprep.subr.mxu0 0.0
    %1065 = vmatpush1.msra.mxu0 %v1055
    %1066 = vmatprep.subr.mxu0 0.0
    %1067 = vmatpush1.msra.mxu0 %v1056
    %1068 = vmatprep.subr.mxu0 0.0
    %1069 = vmatpush1.msra.mxu0 0.0
    %1070 = vmatprep.subr.mxu0 0.0
    %1071 = vmatpush1.msra.mxu0 0.0
    %1072 = vmatprep.subr.mxu0 0.0
    %1073 = vmatpush1.msra.mxu0 0.0
    %1074 = vmatprep.subr.mxu0 0.0
    %1075 = vmatpush1.msra.mxu0 0.0
    %1076 = vmatprep.subr.mxu0 0.0
    %1077 = vmatpush1.msra.mxu0 0.0
    %1078 = vmatprep.subr.mxu0 0.0
    %1079 = vmatpush1.msra.mxu0 0.0
    %1080 = vmatprep.subr.mxu0 0.0
    %1081 = vmatpush1.msra.mxu0 0.0
    %1082 = vmatprep.subr.mxu0 0.0
    %1083 = vmatpush1.msra.mxu0 0.0
    %1084 = vmatprep.subr.mxu0 0.0
    %1085 = vmatpush1.msra.mxu0 0.0
    %1086 = vmatprep.subr.mxu0 0.0
    %1087 = vmatpush1.msra.mxu0 0.0
    %1088 = vmatprep.subr.mxu0 0.0
    %1089 = vmatpush1.msra.mxu0 0.0
    %1090 = vmatprep.subr.mxu0 0.0
    %1091 = vmatpush1.msra.mxu0 0.0
    %1092 = vmatprep.subr.mxu0 0.0
    %1093 = vmatpush1.msra.mxu0 0.0
    %1094 = vmatprep.subr.mxu0 0.0
    %1095 = vmatpush1.msra.mxu0 0.0
    %1096 = vmatprep.subr.mxu0 0.0
    %1097 = vmatpush1.msra.mxu0 0.0
    %1098 = vmatprep.subr.mxu0 0.0
    %1099 = vmatpush1.msra.mxu0 0.0
    %1100 = vmatprep.subr.mxu0 0.0
    %1101 = vmatpush1.msra.mxu0 0.0
    %1102 = vmatprep.subr.mxu0 0.0
    %1103 = vmatpush1.msra.mxu0 0.0
    %1104 = vmatprep.subr.mxu0 0.0
    %1105 = vmatpush1.msra.mxu0 0.0
    %1106 = vmatprep.subr.mxu0 0.0
    %1107 = vmatpush1.msra.mxu0 0.0
    %1108 = vmatprep.subr.mxu0 0.0
    %1109 = vmatpush1.msra.mxu0 0.0
    %1110 = vmatprep.subr.mxu0 0.0
    %1111 = vmatpush1.msra.mxu0 0.0
    %1112 = vmatprep.subr.mxu0 0.0
    %1113 = vmatpush1.msra.mxu0 0.0
    %1114 = vmatprep.subr.mxu0 0.0
    %1115 = vmatpush1.msra.mxu0 0.0
    %1116 = vmatprep.subr.mxu0 0.0
    %1117 = vmatpush1.msra.mxu0 0.0
    %1118 = vmatprep.subr.mxu0 0.0
    %1119 = vmatpush1.msra.mxu0 0.0
    %1120 = vmatprep.subr.mxu0 0.0
    %1121 = vmatpush1.msra.mxu0 0.0
    %1122 = vmatprep.subr.mxu0 0.0
    %1123 = vmatpush1.msra.mxu0 0.0
    %1124 = vmatprep.mubr.f32.mxu0 0.0
    %1125 = vmatmul.mubr.f32.gmra.mrb[0].mxu0 %v1058
    %v1126 = vpop.f32.mrb[0].mxu0
    %v1127 = vadd.f32 0.0, %v1126
    %v1128 = vpop.f32.mrb[0].mxu0
    %1129 = vdwg.mxu0
    %v1130 = vmul.f32 %v1050, %v1127
    %v1131 = vld [vmem:[#allocation10] sm:$0xff]
    %v1132 = vld [vmem:[#allocation10 + $0x8] sm:$0xff]
    %v1133 = vld [vmem:[#allocation10 + $0x10] sm:$0xff]
    %v1134 = vld [vmem:[#allocation10 + $0x18] sm:$0xff]
    %s1135 = scalar_lea.vmem [#allocation9], 32
    %v1136 = vld [vmem:[%s1135] sm:$0xff]
    %v1137 = vld [vmem:[%s1135 + $0x8] sm:$0xff]
    %v1138 = vld [vmem:[%s1135 + $0x10] sm:$0xff]
    %v1139 = vld [vmem:[%s1135 + $0x18] sm:$0xff]
    %1140 = vmatprep.subr.mxu0 0.0
    %1141 = vmatpush1.msra.mxu0 %v1136
    %1142 = vmatprep.subr.mxu0 0.0
    %1143 = vmatpush1.msra.mxu0 %v1137
    %1144 = vmatprep.subr.mxu0 0.0
    %1145 = vmatpush1.msra.mxu0 %v1138
    %1146 = vmatprep.subr.mxu0 0.0
    %1147 = vmatpush1.msra.mxu0 %v1139
    %1148 = vmatprep.subr.mxu0 0.0
    %1149 = vmatpush1.msra.mxu0 0.0
    %1150 = vmatprep.subr.mxu0 0.0
    %1151 = vmatpush1.msra.mxu0 0.0
    %1152 = vmatprep.subr.mxu0 0.0
    %1153 = vmatpush1.msra.mxu0 0.0
    %1154 = vmatprep.subr.mxu0 0.0
    %1155 = vmatpush1.msra.mxu0 0.0
    %1156 = vmatprep.subr.mxu0 0.0
    %1157 = vmatpush1.msra.mxu0 0.0
    %1158 = vmatprep.subr.mxu0 0.0
    %1159 = vmatpush1.msra.mxu0 0.0
    %1160 = vmatprep.subr.mxu0 0.0
    %1161 = vmatpush1.msra.mxu0 0.0
    %1162 = vmatprep.subr.mxu0 0.0
    %1163 = vmatpush1.msra.mxu0 0.0
    %1164 = vmatprep.subr.mxu0 0.0
    %1165 = vmatpush1.msra.mxu0 0.0
    %1166 = vmatprep.subr.mxu0 0.0
    %1167 = vmatpush1.msra.mxu0 0.0
    %1168 = vmatprep.subr.mxu0 0.0
    %1169 = vmatpush1.msra.mxu0 0.0
    %1170 = vmatprep.subr.mxu0 0.0
    %1171 = vmatpush1.msra.mxu0 0.0
    %1172 = vmatprep.subr.mxu0 0.0
    %1173 = vmatpush1.msra.mxu0 0.0
    %1174 = vmatprep.subr.mxu0 0.0
    %1175 = vmatpush1.msra.mxu0 0.0
    %1176 = vmatprep.subr.mxu0 0.0
    %1177 = vmatpush1.msra.mxu0 0.0
    %1178 = vmatprep.subr.mxu0 0.0
    %1179 = vmatpush1.msra.mxu0 0.0
    %1180 = vmatprep.subr.mxu0 0.0
    %1181 = vmatpush1.msra.mxu0 0.0
    %1182 = vmatprep.subr.mxu0 0.0
    %1183 = vmatpush1.msra.mxu0 0.0
    %1184 = vmatprep.subr.mxu0 0.0
    %1185 = vmatpush1.msra.mxu0 0.0
    %1186 = vmatprep.subr.mxu0 0.0
    %1187 = vmatpush1.msra.mxu0 0.0
    %1188 = vmatprep.subr.mxu0 0.0
    %1189 = vmatpush1.msra.mxu0 0.0
    %1190 = vmatprep.subr.mxu0 0.0
    %1191 = vmatpush1.msra.mxu0 0.0
    %1192 = vmatprep.subr.mxu0 0.0
    %1193 = vmatpush1.msra.mxu0 0.0
    %1194 = vmatprep.subr.mxu0 0.0
    %1195 = vmatpush1.msra.mxu0 0.0
    %1196 = vmatprep.subr.mxu0 0.0
    %1197 = vmatpush1.msra.mxu0 0.0
    %1198 = vmatprep.subr.mxu0 0.0
    %1199 = vmatpush1.msra.mxu0 0.0
    %1200 = vmatprep.subr.mxu0 0.0
    %1201 = vmatpush1.msra.mxu0 0.0
    %1202 = vmatprep.subr.mxu0 0.0
    %1203 = vmatpush1.msra.mxu0 0.0
    %1204 = vmatprep.mubr.f32.mxu0 0.0
    %1205 = vmatmul.mubr.f32.gmra.mrb[0].mxu0 %v1058
    %v1206 = vpop.f32.mrb[0].mxu0
    %v1207 = vadd.f32 0.0, %v1206
    %v1208 = vpop.f32.mrb[0].mxu0
    %1209 = vdwg.mxu0
    %v1210 = vmul.f32 %v1050, %v1207
    %s1211 = scalar_lea.vmem [#allocation10], 32
    %v1212 = vld [vmem:[%s1211] sm:$0xff]
    %v1213 = vld [vmem:[%s1211 + $0x8] sm:$0xff]
    %v1214 = vld [vmem:[%s1211 + $0x10] sm:$0xff]
    %v1215 = vld [vmem:[%s1211 + $0x18] sm:$0xff]
    %v1217 = vsel %vm905, %v1210, 0
    %1219 = vmatprep.subr.mxu0 0.0
    %1220 = vmatpush1.msra.mxu0 %v1212
    %1221 = vmatprep.subr.mxu0 0.0
    %1222 = vmatpush1.msra.mxu0 %v1213
    %1223 = vmatprep.subr.mxu0 0.0
    %1224 = vmatpush1.msra.mxu0 %v1214
    %1225 = vmatprep.subr.mxu0 0.0
    %1226 = vmatpush1.msra.mxu0 %v1215
    %1227 = vmatprep.subr.mxu0 0.0
    %1228 = vmatpush1.msra.mxu0 0.0
    %1229 = vmatprep.subr.mxu0 0.0
    %1230 = vmatpush1.msra.mxu0 0.0
    %1231 = vmatprep.subr.mxu0 0.0
    %1232 = vmatpush1.msra.mxu0 0.0
    %1233 = vmatprep.subr.mxu0 0.0
    %1234 = vmatpush1.msra.mxu0 0.0
    %1235 = vmatprep.subr.mxu0 0.0
    %1236 = vmatpush1.msra.mxu0 0.0
    %1237 = vmatprep.subr.mxu0 0.0
    %1238 = vmatpush1.msra.mxu0 0.0
    %1239 = vmatprep.subr.mxu0 0.0
    %1240 = vmatpush1.msra.mxu0 0.0
    %1241 = vmatprep.subr.mxu0 0.0
    %1242 = vmatpush1.msra.mxu0 0.0
    %1243 = vmatprep.subr.mxu0 0.0
    %1244 = vmatpush1.msra.mxu0 0.0
    %1245 = vmatprep.subr.mxu0 0.0
    %1246 = vmatpush1.msra.mxu0 0.0
    %1247 = vmatprep.subr.mxu0 0.0
    %1248 = vmatpush1.msra.mxu0 0.0
    %1249 = vmatprep.subr.mxu0 0.0
    %1250 = vmatpush1.msra.mxu0 0.0
    %1251 = vmatprep.subr.mxu0 0.0
    %1252 = vmatpush1.msra.mxu0 0.0
    %1253 = vmatprep.subr.mxu0 0.0
    %1254 = vmatpush1.msra.mxu0 0.0
    %1255 = vmatprep.subr.mxu0 0.0
    %1256 = vmatpush1.msra.mxu0 0.0
    %1257 = vmatprep.subr.mxu0 0.0
    %1258 = vmatpush1.msra.mxu0 0.0
    %1259 = vmatprep.subr.mxu0 0.0
    %1260 = vmatpush1.msra.mxu0 0.0
    %1261 = vmatprep.subr.mxu0 0.0
    %1262 = vmatpush1.msra.mxu0 0.0
    %1263 = vmatprep.subr.mxu0 0.0
    %1264 = vmatpush1.msra.mxu0 0.0
    %1265 = vmatprep.subr.mxu0 0.0
    %1266 = vmatpush1.msra.mxu0 0.0
    %1267 = vmatprep.subr.mxu0 0.0
    %1268 = vmatpush1.msra.mxu0 0.0
    %1269 = vmatprep.subr.mxu0 0.0
    %1270 = vmatpush1.msra.mxu0 0.0
    %1271 = vmatprep.subr.mxu0 0.0
    %1272 = vmatpush1.msra.mxu0 0.0
    %1273 = vmatprep.subr.mxu0 0.0
    %1274 = vmatpush1.msra.mxu0 0.0
    %1275 = vmatprep.subr.mxu0 0.0
    %1276 = vmatpush1.msra.mxu0 0.0
    %1277 = vmatprep.subr.mxu0 0.0
    %1278 = vmatpush1.msra.mxu0 0.0
    %1279 = vmatprep.subr.mxu0 0.0
    %1280 = vmatpush1.msra.mxu0 0.0
    %1281 = vmatprep.subr.mxu0 0.0
    %1282 = vmatpush1.msra.mxu0 0.0
    %1283 = vmatprep.mubr.f32.mxu0 0.0
    %1284 = vmatmul.mubr.f32.gmra.mrb[0].mxu0 %v1217
    %v1285 = vpop.f32.mrb[0].mxu0
    %v1286 = vadd.f32 0.0, %v1285
    %v1287 = vpop.f32.mrb[0].mxu0
    %1288 = vdwg.mxu0
    %v1290 = vsel %vm905, %v1130, 0
    %1292 = vmatprep.subr.mxu0 0.0
    %1293 = vmatpush1.msra.mxu0 %v1131
    %1294 = vmatprep.subr.mxu0 0.0
    %1295 = vmatpush1.msra.mxu0 %v1132
    %1296 = vmatprep.subr.mxu0 0.0
    %1297 = vmatpush1.msra.mxu0 %v1133
    %1298 = vmatprep.subr.mxu0 0.0
    %1299 = vmatpush1.msra.mxu0 %v1134
    %1300 = vmatprep.subr.mxu0 0.0
    %1301 = vmatpush1.msra.mxu0 0.0
    %1302 = vmatprep.subr.mxu0 0.0
    %1303 = vmatpush1.msra.mxu0 0.0
    %1304 = vmatprep.subr.mxu0 0.0
    %1305 = vmatpush1.msra.mxu0 0.0
    %1306 = vmatprep.subr.mxu0 0.0
    %1307 = vmatpush1.msra.mxu0 0.0
    %1308 = vmatprep.subr.mxu0 0.0
    %1309 = vmatpush1.msra.mxu0 0.0
    %1310 = vmatprep.subr.mxu0 0.0
    %1311 = vmatpush1.msra.mxu0 0.0
    %1312 = vmatprep.subr.mxu0 0.0
    %1313 = vmatpush1.msra.mxu0 0.0
    %1314 = vmatprep.subr.mxu0 0.0
    %1315 = vmatpush1.msra.mxu0 0.0
    %1316 = vmatprep.subr.mxu0 0.0
    %1317 = vmatpush1.msra.mxu0 0.0
    %1318 = vmatprep.subr.mxu0 0.0
    %1319 = vmatpush1.msra.mxu0 0.0
    %1320 = vmatprep.subr.mxu0 0.0
    %1321 = vmatpush1.msra.mxu0 0.0
    %1322 = vmatprep.subr.mxu0 0.0
    %1323 = vmatpush1.msra.mxu0 0.0
    %1324 = vmatprep.subr.mxu0 0.0
    %1325 = vmatpush1.msra.mxu0 0.0
    %1326 = vmatprep.subr.mxu0 0.0
    %1327 = vmatpush1.msra.mxu0 0.0
    %1328 = vmatprep.subr.mxu0 0.0
    %1329 = vmatpush1.msra.mxu0 0.0
    %1330 = vmatprep.subr.mxu0 0.0
    %1331 = vmatpush1.msra.mxu0 0.0
    %1332 = vmatprep.subr.mxu0 0.0
    %1333 = vmatpush1.msra.mxu0 0.0
    %1334 = vmatprep.subr.mxu0 0.0
    %1335 = vmatpush1.msra.mxu0 0.0
    %1336 = vmatprep.subr.mxu0 0.0
    %1337 = vmatpush1.msra.mxu0 0.0
    %1338 = vmatprep.subr.mxu0 0.0
    %1339 = vmatpush1.msra.mxu0 0.0
    %1340 = vmatprep.subr.mxu0 0.0
    %1341 = vmatpush1.msra.mxu0 0.0
    %1342 = vmatprep.subr.mxu0 0.0
    %1343 = vmatpush1.msra.mxu0 0.0
    %1344 = vmatprep.subr.mxu0 0.0
    %1345 = vmatpush1.msra.mxu0 0.0
    %1346 = vmatprep.subr.mxu0 0.0
    %1347 = vmatpush1.msra.mxu0 0.0
    %1348 = vmatprep.subr.mxu0 0.0
    %1349 = vmatpush1.msra.mxu0 0.0
    %1350 = vmatprep.subr.mxu0 0.0
    %1351 = vmatpush1.msra.mxu0 0.0
    %1352 = vmatprep.subr.mxu0 0.0
    %1353 = vmatpush1.msra.mxu0 0.0
    %1354 = vmatprep.subr.mxu0 0.0
    %1355 = vmatpush1.msra.mxu0 0.0
    %1356 = vmatprep.mubr.f32.mxu0 0.0
    %1357 = vmatmul.mubr.f32.gmra.mrb[0].mxu0 %v1290
    %v1358 = vpop.f32.mrb[0].mxu0
    %v1359 = vadd.f32 %v1286, %v1358
    %v1360 = vpop.f32.mrb[0].mxu0
    %1361 = vdwg.mxu0
    %s1362 = scalar_lea.vmem [#allocation9], 64
    %v1363 = vld [vmem:[%s1362] sm:$0xff]
    %v1364 = vld [vmem:[%s1362 + $0x8] sm:$0xff]
    %v1365 = vld [vmem:[%s1362 + $0x10] sm:$0xff]
    %v1366 = vld [vmem:[%s1362 + $0x18] sm:$0xff]
    %1367 = vmatprep.subr.mxu0 0.0
    %1368 = vmatpush1.msra.mxu0 %v1363
    %1369 = vmatprep.subr.mxu0 0.0
    %1370 = vmatpush1.msra.mxu0 %v1364
    %1371 = vmatprep.subr.mxu0 0.0
    %1372 = vmatpush1.msra.mxu0 %v1365
    %1373 = vmatprep.subr.mxu0 0.0
    %1374 = vmatpush1.msra.mxu0 %v1366
    %1375 = vmatprep.subr.mxu0 0.0
    %1376 = vmatpush1.msra.mxu0 0.0
    %1377 = vmatprep.subr.mxu0 0.0
    %1378 = vmatpush1.msra.mxu0 0.0
    %1379 = vmatprep.subr.mxu0 0.0
    %1380 = vmatpush1.msra.mxu0 0.0
    %1381 = vmatprep.subr.mxu0 0.0
    %1382 = vmatpush1.msra.mxu0 0.0
    %1383 = vmatprep.subr.mxu0 0.0
    %1384 = vmatpush1.msra.mxu0 0.0
    %1385 = vmatprep.subr.mxu0 0.0
    %1386 = vmatpush1.msra.mxu0 0.0
    %1387 = vmatprep.subr.mxu0 0.0
    %1388 = vmatpush1.msra.mxu0 0.0
    %1389 = vmatprep.subr.mxu0 0.0
    %1390 = vmatpush1.msra.mxu0 0.0
    %1391 = vmatprep.subr.mxu0 0.0
    %1392 = vmatpush1.msra.mxu0 0.0
    %1393 = vmatprep.subr.mxu0 0.0
    %1394 = vmatpush1.msra.mxu0 0.0
    %1395 = vmatprep.subr.mxu0 0.0
    %1396 = vmatpush1.msra.mxu0 0.0
    %1397 = vmatprep.subr.mxu0 0.0
    %1398 = vmatpush1.msra.mxu0 0.0
    %1399 = vmatprep.subr.mxu0 0.0
    %1400 = vmatpush1.msra.mxu0 0.0
    %1401 = vmatprep.subr.mxu0 0.0
    %1402 = vmatpush1.msra.mxu0 0.0
    %1403 = vmatprep.subr.mxu0 0.0
    %1404 = vmatpush1.msra.mxu0 0.0
    %1405 = vmatprep.subr.mxu0 0.0
    %1406 = vmatpush1.msra.mxu0 0.0
    %1407 = vmatprep.subr.mxu0 0.0
    %1408 = vmatpush1.msra.mxu0 0.0
    %1409 = vmatprep.subr.mxu0 0.0
    %1410 = vmatpush1.msra.mxu0 0.0
    %1411 = vmatprep.subr.mxu0 0.0
    %1412 = vmatpush1.msra.mxu0 0.0
    %1413 = vmatprep.subr.mxu0 0.0
    %1414 = vmatpush1.msra.mxu0 0.0
    %1415 = vmatprep.subr.mxu0 0.0
    %1416 = vmatpush1.msra.mxu0 0.0
    %1417 = vmatprep.subr.mxu0 0.0
    %1418 = vmatpush1.msra.mxu0 0.0
    %1419 = vmatprep.subr.mxu0 0.0
    %1420 = vmatpush1.msra.mxu0 0.0
    %1421 = vmatprep.subr.mxu0 0.0
    %1422 = vmatpush1.msra.mxu0 0.0
    %1423 = vmatprep.subr.mxu0 0.0
    %1424 = vmatpush1.msra.mxu0 0.0
    %1425 = vmatprep.subr.mxu0 0.0
    %1426 = vmatpush1.msra.mxu0 0.0
    %1427 = vmatprep.subr.mxu0 0.0
    %1428 = vmatpush1.msra.mxu0 0.0
    %1429 = vmatprep.subr.mxu0 0.0
    %1430 = vmatpush1.msra.mxu0 0.0
    %1431 = vmatprep.mubr.f32.mxu0 0.0
    %1432 = vmatmul.mubr.f32.gmra.mrb[0].mxu0 %v1058
    %v1433 = vpop.f32.mrb[0].mxu0
    %v1434 = vadd.f32 0.0, %v1433
    %v1435 = vpop.f32.mrb[0].mxu0
    %1436 = vdwg.mxu0
    %v1437 = vmul.f32 %v1050, %v1434
    %s1438 = scalar_lea.vmem [#allocation10], 64
    %v1439 = vld [vmem:[%s1438] sm:$0xff]
    %v1440 = vld [vmem:[%s1438 + $0x8] sm:$0xff]
    %v1441 = vld [vmem:[%s1438 + $0x10] sm:$0xff]
    %v1442 = vld [vmem:[%s1438 + $0x18] sm:$0xff]
    %v1444 = vsel %vm905, %v1437, 0
    %1446 = vmatprep.subr.mxu0 0.0
    %1447 = vmatpush1.msra.mxu0 %v1439
    %1448 = vmatprep.subr.mxu0 0.0
    %1449 = vmatpush1.msra.mxu0 %v1440
    %1450 = vmatprep.subr.mxu0 0.0
    %1451 = vmatpush1.msra.mxu0 %v1441
    %1452 = vmatprep.subr.mxu0 0.0
    %1453 = vmatpush1.msra.mxu0 %v1442
    %1454 = vmatprep.subr.mxu0 0.0
    %1455 = vmatpush1.msra.mxu0 0.0
    %1456 = vmatprep.subr.mxu0 0.0
    %1457 = vmatpush1.msra.mxu0 0.0
    %1458 = vmatprep.subr.mxu0 0.0
    %1459 = vmatpush1.msra.mxu0 0.0
    %1460 = vmatprep.subr.mxu0 0.0
    %1461 = vmatpush1.msra.mxu0 0.0
    %1462 = vmatprep.subr.mxu0 0.0
    %1463 = vmatpush1.msra.mxu0 0.0
    %1464 = vmatprep.subr.mxu0 0.0
    %1465 = vmatpush1.msra.mxu0 0.0
    %1466 = vmatprep.subr.mxu0 0.0
    %1467 = vmatpush1.msra.mxu0 0.0
    %1468 = vmatprep.subr.mxu0 0.0
    %1469 = vmatpush1.msra.mxu0 0.0
    %1470 = vmatprep.subr.mxu0 0.0
    %1471 = vmatpush1.msra.mxu0 0.0
    %1472 = vmatprep.subr.mxu0 0.0
    %1473 = vmatpush1.msra.mxu0 0.0
    %1474 = vmatprep.subr.mxu0 0.0
    %1475 = vmatpush1.msra.mxu0 0.0
    %1476 = vmatprep.subr.mxu0 0.0
    %1477 = vmatpush1.msra.mxu0 0.0
    %1478 = vmatprep.subr.mxu0 0.0
    %1479 = vmatpush1.msra.mxu0 0.0
    %1480 = vmatprep.subr.mxu0 0.0
    %1481 = vmatpush1.msra.mxu0 0.0
    %1482 = vmatprep.subr.mxu0 0.0
    %1483 = vmatpush1.msra.mxu0 0.0
    %1484 = vmatprep.subr.mxu0 0.0
    %1485 = vmatpush1.msra.mxu0 0.0
    %1486 = vmatprep.subr.mxu0 0.0
    %1487 = vmatpush1.msra.mxu0 0.0
    %1488 = vmatprep.subr.mxu0 0.0
    %1489 = vmatpush1.msra.mxu0 0.0
    %1490 = vmatprep.subr.mxu0 0.0
    %1491 = vmatpush1.msra.mxu0 0.0
    %1492 = vmatprep.subr.mxu0 0.0
    %1493 = vmatpush1.msra.mxu0 0.0
    %1494 = vmatprep.subr.mxu0 0.0
    %1495 = vmatpush1.msra.mxu0 0.0
    %1496 = vmatprep.subr.mxu0 0.0
    %1497 = vmatpush1.msra.mxu0 0.0
    %1498 = vmatprep.subr.mxu0 0.0
    %1499 = vmatpush1.msra.mxu0 0.0
    %1500 = vmatprep.subr.mxu0 0.0
    %1501 = vmatpush1.msra.mxu0 0.0
    %1502 = vmatprep.subr.mxu0 0.0
    %1503 = vmatpush1.msra.mxu0 0.0
    %1504 = vmatprep.subr.mxu0 0.0
    %1505 = vmatpush1.msra.mxu0 0.0
    %1506 = vmatprep.subr.mxu0 0.0
    %1507 = vmatpush1.msra.mxu0 0.0
    %1508 = vmatprep.subr.mxu0 0.0
    %1509 = vmatpush1.msra.mxu0 0.0
    %1510 = vmatprep.mubr.f32.mxu0 0.0
    %1511 = vmatmul.mubr.f32.gmra.mrb[0].mxu0 %v1444
    %v1512 = vpop.f32.mrb[0].mxu0
    %v1513 = vadd.f32 0.0, %v1512
    %v1514 = vpop.f32.mrb[0].mxu0
    %1515 = vdwg.mxu0
    %v1516 = vadd.f32 %v1359, %v1513
    %s1517 = scalar_lea.vmem [#allocation9], 96
    %v1518 = vld [vmem:[%s1517] sm:$0xff]
    %v1519 = vld [vmem:[%s1517 + $0x8] sm:$0xff]
    %v1520 = vld [vmem:[%s1517 + $0x10] sm:$0xff]
    %v1521 = vld [vmem:[%s1517 + $0x18] sm:$0xff]
    %1522 = vmatprep.subr.mxu0 0.0
    %1523 = vmatpush1.msra.mxu0 %v1518
    %1524 = vmatprep.subr.mxu0 0.0
    %1525 = vmatpush1.msra.mxu0 %v1519
    %1526 = vmatprep.subr.mxu0 0.0
    %1527 = vmatpush1.msra.mxu0 %v1520
    %1528 = vmatprep.subr.mxu0 0.0
    %1529 = vmatpush1.msra.mxu0 %v1521
    %1530 = vmatprep.subr.mxu0 0.0
    %1531 = vmatpush1.msra.mxu0 0.0
    %1532 = vmatprep.subr.mxu0 0.0
    %1533 = vmatpush1.msra.mxu0 0.0
    %1534 = vmatprep.subr.mxu0 0.0
    %1535 = vmatpush1.msra.mxu0 0.0
    %1536 = vmatprep.subr.mxu0 0.0
    %1537 = vmatpush1.msra.mxu0 0.0
    %1538 = vmatprep.subr.mxu0 0.0
    %1539 = vmatpush1.msra.mxu0 0.0
    %1540 = vmatprep.subr.mxu0 0.0
    %1541 = vmatpush1.msra.mxu0 0.0
    %1542 = vmatprep.subr.mxu0 0.0
    %1543 = vmatpush1.msra.mxu0 0.0
    %1544 = vmatprep.subr.mxu0 0.0
    %1545 = vmatpush1.msra.mxu0 0.0
    %1546 = vmatprep.subr.mxu0 0.0
    %1547 = vmatpush1.msra.mxu0 0.0
    %1548 = vmatprep.subr.mxu0 0.0
    %1549 = vmatpush1.msra.mxu0 0.0
    %1550 = vmatprep.subr.mxu0 0.0
    %1551 = vmatpush1.msra.mxu0 0.0
    %1552 = vmatprep.subr.mxu0 0.0
    %1553 = vmatpush1.msra.mxu0 0.0
    %1554 = vmatprep.subr.mxu0 0.0
    %1555 = vmatpush1.msra.mxu0 0.0
    %1556 = vmatprep.subr.mxu0 0.0
    %1557 = vmatpush1.msra.mxu0 0.0
    %1558 = vmatprep.subr.mxu0 0.0
    %1559 = vmatpush1.msra.mxu0 0.0
    %1560 = vmatprep.subr.mxu0 0.0
    %1561 = vmatpush1.msra.mxu0 0.0
    %1562 = vmatprep.subr.mxu0 0.0
    %1563 = vmatpush1.msra.mxu0 0.0
    %1564 = vmatprep.subr.mxu0 0.0
    %1565 = vmatpush1.msra.mxu0 0.0
    %1566 = vmatprep.subr.mxu0 0.0
    %1567 = vmatpush1.msra.mxu0 0.0
    %1568 = vmatprep.subr.mxu0 0.0
    %1569 = vmatpush1.msra.mxu0 0.0
    %1570 = vmatprep.subr.mxu0 0.0
    %1571 = vmatpush1.msra.mxu0 0.0
    %1572 = vmatprep.subr.mxu0 0.0
    %1573 = vmatpush1.msra.mxu0 0.0
    %1574 = vmatprep.subr.mxu0 0.0
    %1575 = vmatpush1.msra.mxu0 0.0
    %1576 = vmatprep.subr.mxu0 0.0
    %1577 = vmatpush1.msra.mxu0 0.0
    %1578 = vmatprep.subr.mxu0 0.0
    %1579 = vmatpush1.msra.mxu0 0.0
    %1580 = vmatprep.subr.mxu0 0.0
    %1581 = vmatpush1.msra.mxu0 0.0
    %1582 = vmatprep.subr.mxu0 0.0
    %1583 = vmatpush1.msra.mxu0 0.0
    %1584 = vmatprep.subr.mxu0 0.0
    %1585 = vmatpush1.msra.mxu0 0.0
    %1586 = vmatprep.mubr.f32.mxu0 0.0
    %1587 = vmatmul.mubr.f32.gmra.mrb[0].mxu0 %v1058
    %v1588 = vpop.f32.mrb[0].mxu0
    %v1589 = vadd.f32 0.0, %v1588
    %v1590 = vpop.f32.mrb[0].mxu0
    %1591 = vdwg.mxu0
    %v1592 = vmul.f32 %v1050, %v1589
    %s1593 = scalar_lea.vmem [#allocation10], 96
    %v1594 = vld [vmem:[%s1593] sm:$0xff]
    %v1595 = vld [vmem:[%s1593 + $0x8] sm:$0xff]
    %v1596 = vld [vmem:[%s1593 + $0x10] sm:$0xff]
    %v1597 = vld [vmem:[%s1593 + $0x18] sm:$0xff]
    %v1599 = vsel %vm905, %v1592, 0
    %1601 = vmatprep.subr.mxu0 0.0
    %1602 = vmatpush1.msra.mxu0 %v1594
    %1603 = vmatprep.subr.mxu0 0.0
    %1604 = vmatpush1.msra.mxu0 %v1595
    %1605 = vmatprep.subr.mxu0 0.0
    %1606 = vmatpush1.msra.mxu0 %v1596
    %1607 = vmatprep.subr.mxu0 0.0
    %1608 = vmatpush1.msra.mxu0 %v1597
    %1609 = vmatprep.subr.mxu0 0.0
    %1610 = vmatpush1.msra.mxu0 0.0
    %1611 = vmatprep.subr.mxu0 0.0
    %1612 = vmatpush1.msra.mxu0 0.0
    %1613 = vmatprep.subr.mxu0 0.0
    %1614 = vmatpush1.msra.mxu0 0.0
    %1615 = vmatprep.subr.mxu0 0.0
    %1616 = vmatpush1.msra.mxu0 0.0
    %1617 = vmatprep.subr.mxu0 0.0
    %1618 = vmatpush1.msra.mxu0 0.0
    %1619 = vmatprep.subr.mxu0 0.0
    %1620 = vmatpush1.msra.mxu0 0.0
    %1621 = vmatprep.subr.mxu0 0.0
    %1622 = vmatpush1.msra.mxu0 0.0
    %1623 = vmatprep.subr.mxu0 0.0
    %1624 = vmatpush1.msra.mxu0 0.0
    %1625 = vmatprep.subr.mxu0 0.0
    %1626 = vmatpush1.msra.mxu0 0.0
    %1627 = vmatprep.subr.mxu0 0.0
    %1628 = vmatpush1.msra.mxu0 0.0
    %1629 = vmatprep.subr.mxu0 0.0
    %1630 = vmatpush1.msra.mxu0 0.0
    %1631 = vmatprep.subr.mxu0 0.0
    %1632 = vmatpush1.msra.mxu0 0.0
    %1633 = vmatprep.subr.mxu0 0.0
    %1634 = vmatpush1.msra.mxu0 0.0
    %1635 = vmatprep.subr.mxu0 0.0
    %1636 = vmatpush1.msra.mxu0 0.0
    %1637 = vmatprep.subr.mxu0 0.0
    %1638 = vmatpush1.msra.mxu0 0.0
    %1639 = vmatprep.subr.mxu0 0.0
    %1640 = vmatpush1.msra.mxu0 0.0
    %1641 = vmatprep.subr.mxu0 0.0
    %1642 = vmatpush1.msra.mxu0 0.0
    %1643 = vmatprep.subr.mxu0 0.0
    %1644 = vmatpush1.msra.mxu0 0.0
    %1645 = vmatprep.subr.mxu0 0.0
    %1646 = vmatpush1.msra.mxu0 0.0
    %1647 = vmatprep.subr.mxu0 0.0
    %1648 = vmatpush1.msra.mxu0 0.0
    %1649 = vmatprep.subr.mxu0 0.0
    %1650 = vmatpush1.msra.mxu0 0.0
    %1651 = vmatprep.subr.mxu0 0.0
    %1652 = vmatpush1.msra.mxu0 0.0
    %1653 = vmatprep.subr.mxu0 0.0
    %1654 = vmatpush1.msra.mxu0 0.0
    %1655 = vmatprep.subr.mxu0 0.0
    %1656 = vmatpush1.msra.mxu0 0.0
    %1657 = vmatprep.subr.mxu0 0.0
    %1658 = vmatpush1.msra.mxu0 0.0
    %1659 = vmatprep.subr.mxu0 0.0
    %1660 = vmatpush1.msra.mxu0 0.0
    %1661 = vmatprep.subr.mxu0 0.0
    %1662 = vmatpush1.msra.mxu0 0.0
    %1663 = vmatprep.subr.mxu0 0.0
    %1664 = vmatpush1.msra.mxu0 0.0
    %1665 = vmatprep.mubr.f32.mxu0 0.0
    %1666 = vmatmul.mubr.f32.gmra.mrb[0].mxu0 %v1599
    %v1667 = vpop.f32.mrb[0].mxu0
    %v1668 = vadd.f32 0.0, %v1667
    %v1669 = vpop.f32.mrb[0].mxu0
    %1670 = vdwg.mxu0
    %v1671 = vadd.f32 %v1516, %v1668
    %1672 = vst.msk [vmem:[%s7] sm:$0xff] %vm319, %v1671
    // Predicated region
    $region54: #{forward.1} parent=1 // pred_check
      _
    $region55: #{forward.1} parent=1 // pred_check_branch
      %1674 = sbr.rel (0) target = $region57
    $region56: #{forward.1} parent=1 // pred_region
      _
    $region57: #{forward.1} parent=1 // pred_fallthru
      _
    // Predicated region
    $region58: #{forward.1} parent=1 // pred_check
      _
    $region59: #{forward.1} parent=1 // pred_check_branch
      %1676 = sbr.rel (0) target = $region61
    $region60: #{forward.1} parent=1 // pred_region
      _
    $region61: #{forward.1} parent=1 // pred_fallthru
      _
    %1677 = vsyncpa [#allocation3], 1
    %1678 = vsyncpa [#allocation5], 1
    %1679 = vsyncpa [#allocation8], 1
    %1680 = vsyncpa [#allocation11], 1

</llo_original>
